<compile_context>
chip_gen: v5e
topology: v5e:2x2
jax: 0.10.0
libtpu: 0.0.40
codegen_flags: <defaults>
</compile_context>

<pallas_src>
import jax
import jax.numpy as jnp
from jax.experimental import pallas as pl
from jax.experimental.pallas import tpu as pltpu


def _round_up(n, m):
    return ((n + m - 1) // m) * m


def _disc_kernel(x_ref, w1_ref, b1_ref, w2_ref, b2_ref, w3_ref, b3_ref, o_ref):
    # x arrives in its HBM dtype (f32 here); cast to bf16 per-tile on the VPU
    # so the dominant HBM stream is read exactly once at its native width.
    x = x_ref[...].astype(jnp.bfloat16)                         # (tb, 512)

    # Layer 1: Linear(512, 256) + LeakyReLU(0.2)  (bf16 MXU, f32 accumulate)
    h1 = jnp.dot(x, w1_ref[...], preferred_element_type=jnp.float32) + b1_ref[...]
    h1 = jnp.maximum(h1, 0.2 * h1)

    # Layer 2: Linear(256, 128) + LeakyReLU(0.2)
    h2 = jnp.dot(h1.astype(jnp.bfloat16), w2_ref[...],
                 preferred_element_type=jnp.float32) + b2_ref[...]
    h2 = jnp.maximum(h2, 0.2 * h2)

    # Layer 3: Linear(128, 1) on the (mostly idle) MXU against w3 zero-padded
    # to (128, 128).  Lane 0 holds the real logit; lanes 1..127 hold b3-only
    # junk that the wrapper slices away.  Keeps the output lane-dense.
    h3 = jnp.dot(h2.astype(jnp.bfloat16), w3_ref[...],
                 preferred_element_type=jnp.float32) + b3_ref[0, 0]

    # Sigmoid: exp on the EUP + reciprocal instead of an explicit f32 divide.
    o_ref[...] = pl.reciprocal(1.0 + jnp.exp(-h3))


def discriminator_forward(x, params, *, tb=None):
    """x: (B, 512); params: PyTorch-equivalent f32 dict; returns (B, 1) f32."""
    B, d_in = x.shape
    assert d_in == 512

    if tb is None:
        # Big tile amortizes the ~0.35 us per-grid-step overhead against the
        # DMA-bound step; multiple of 128 keeps the MXU M-dim full; cap at
        # 2048 so the double-buffered f32 x tile (+ h1/h2 intermediates and
        # the lane-dense output block) stays inside the 32 MiB scoped-VMEM
        # default (and v7x keeps >=2 grid steps once B > 2048 for megacore).
        tb = min(2048, _round_up(B, 128))

    grid = (pl.cdiv(B, tb),)

    # Weight casts are tiny and one-time; x is passed through untouched.
    w1 = params["w1"].astype(jnp.bfloat16)                      # (512, 256)
    w2 = params["w2"].astype(jnp.bfloat16)                      # (256, 128)
    # Zero-pad layer-3 weights to a full 128-wide MXU result tile.
    w3 = jnp.pad(params["w3"], ((0, 0), (0, 127))).astype(jnp.bfloat16)  # (128, 128)
    b1, b2 = params["b1"], params["b2"]
    b3 = params["b3"].reshape(1, 1).astype(jnp.float32)         # SMEM scalar

    def resident(shape):
        # Constant block index -> DMA'd once, resident across all grid steps.
        return pl.BlockSpec(shape, lambda i: tuple(0 for _ in shape))

    out = pl.pallas_call(
        _disc_kernel,
        out_shape=jax.ShapeDtypeStruct((B, 128), jnp.float32),
        grid_spec=pltpu.PrefetchScalarGridSpec(
            num_scalar_prefetch=0,
            grid=grid,
            in_specs=[
                # Ragged last batch tile is handled by Pallas partial blocks:
                # OOB rows load garbage (row-independent MLP -> harmless) and
                # OOB output rows are never stored.
                pl.BlockSpec((tb, 512), lambda i: (i, 0)),       # x tile over batch
                resident((512, 256)), resident((1, 256)),        # layer 1 params
                resident((256, 128)), resident((1, 128)),        # layer 2 params
                resident((128, 128)),                            # padded w3
                pl.BlockSpec(memory_space=pltpu.MemorySpace.SMEM),  # b3 scalar
            ],
            out_specs=pl.BlockSpec((tb, 128), lambda i: (i, 0)),
        ),
        compiler_params=pltpu.CompilerParams(
            dimension_semantics=("parallel",),
        ),
    )(x, w1, b1, w2, b2, w3, b3)

    return out[:, :1]                                            # (B, 1)


def init_params(key):
    """Deterministic synthetic parameters (shapes from Discriminator.__init__), f32."""
    ks = jax.random.split(key, 6)

    def lin(kw, kb, fan_in, fan_out):
        bound = 1.0 / jnp.sqrt(fan_in)
        w = jax.random.uniform(kw, (fan_in, fan_out), jnp.float32, -bound, bound)
        b = jax.random.uniform(kb, (1, fan_out), jnp.float32, -bound, bound)
        return w, b

    w1, b1 = lin(ks[0], ks[1], 512, 256)
    w2, b2 = lin(ks[2], ks[3], 256, 128)
    w3, b3 = lin(ks[4], ks[5], 128, 1)
    return {"w1": w1, "b1": b1, "w2": w2, "b2": b2, "w3": w3, "b3": b3}


def _reference(x, p):
    """Pure-JAX reference with the same bf16-matmul / f32-accumulate recipe."""
    h = jnp.dot(x.astype(jnp.bfloat16), p["w1"].astype(jnp.bfloat16),
                preferred_element_type=jnp.float32) + p["b1"]
    h = jnp.where(h > 0, h, 0.2 * h)
    h = jnp.dot(h.astype(jnp.bfloat16), p["w2"].astype(jnp.bfloat16),
                preferred_element_type=jnp.float32) + p["b2"]
    h = jnp.where(h > 0, h, 0.2 * h)
    h = jnp.dot(h.astype(jnp.bfloat16), p["w3"].astype(jnp.bfloat16),
                preferred_element_type=jnp.float32) + p["b3"]
    return jax.nn.sigmoid(h)


if __name__ == "__main__":
    key = jax.random.PRNGKey(0)
    k_param, k_x = jax.random.split(key)
    params = init_params(k_param)

    B = 200  # arbitrary (non-multiple-of-tile) batch; feature dim fixed at 512
    x = jax.random.normal(k_x, (B, 512), jnp.float32)
    ref = _reference(x, params)

    # Default tile (single grid step for this small batch).
    out = jax.block_until_ready(discriminator_forward(x, params))
    assert out.shape == (B, 1)
    assert jnp.allclose(out, ref, atol=2e-3, rtol=2e-3)

    # Small forced tile -> multi-step grid with a ragged last tile.
    out2 = jax.block_until_ready(discriminator_forward(x, params, tb=128))
    assert out2.shape == (B, 1)
    assert jnp.allclose(out2, ref, atol=2e-3, rtol=2e-3)

    print("KERNEL_OK")
</pallas_src>

<mosaic_0001>
module attributes {stable_mosaic.version = 11 : i64} {
  func.func @_disc_kernel(%arg0: i32, %arg1: memref<256x512xf32, #tpu.memory_space<vmem>>, %arg2: memref<512x256xbf16, #tpu.memory_space<vmem>>, %arg3: memref<1x256xf32, #tpu.memory_space<vmem>>, %arg4: memref<256x128xbf16, #tpu.memory_space<vmem>>, %arg5: memref<1x128xf32, #tpu.memory_space<vmem>>, %arg6: memref<128x128xbf16, #tpu.memory_space<vmem>>, %arg7: memref<1x1xf32, #tpu.memory_space<smem>>, %arg8: memref<256x128xf32, #tpu.memory_space<vmem>>) attributes {dimension_semantics = [#tpu.dimension_semantics<parallel>], iteration_bounds = array<i64: 1>, scalar_prefetch = 0 : i64, scratch_operands = 0 : i64, tpu.core_type = #tpu.core_type<tc>, window_params = [{transform_indices = @transform_0, window_bounds = array<i64: 256, 512>}, {pipeline_mode = #tpu.pipeline_mode<synchronous>, transform_indices = @transform_1, window_bounds = array<i64: 512, 256>}, {pipeline_mode = #tpu.pipeline_mode<synchronous>, transform_indices = @transform_2, window_bounds = array<i64: 1, 256>}, {pipeline_mode = #tpu.pipeline_mode<synchronous>, transform_indices = @transform_3, window_bounds = array<i64: 256, 128>}, {pipeline_mode = #tpu.pipeline_mode<synchronous>, transform_indices = @transform_4, window_bounds = array<i64: 1, 128>}, {pipeline_mode = #tpu.pipeline_mode<synchronous>, transform_indices = @transform_5, window_bounds = array<i64: 128, 128>}, {transform_indices = @transform_6, window_bounds = array<i64: 1, 1>}, {transform_indices = @transform_7, window_bounds = array<i64: 256, 128>}]} {
    %c0 = arith.constant 0 : index
    %c0_0 = arith.constant 0 : index
    %0 = vector.load %arg1[%c0, %c0_0] : memref<256x512xf32, #tpu.memory_space<vmem>>, vector<256x512xf32>
    %1 = arith.truncf %0 : vector<256x512xf32> to vector<256x512xbf16>
    %c0_1 = arith.constant 0 : index
    %c0_2 = arith.constant 0 : index
    %2 = vector.load %arg2[%c0_1, %c0_2] : memref<512x256xbf16, #tpu.memory_space<vmem>>, vector<512x256xbf16>
    %cst = arith.constant dense<0.000000e+00> : vector<256x256xf32>
    %3 = tpu.matmul %1, %2, %cst {dimension_numbers = #tpu.dot_dimension_numbers<[1], [0], [0], [1], [0, 0, 1, 1], [], []>} : vector<256x512xbf16>, vector<512x256xbf16>, vector<256x256xf32> -> vector<256x256xf32>
    %c0_3 = arith.constant 0 : index
    %c0_4 = arith.constant 0 : index
    %4 = vector.load %arg3[%c0_3, %c0_4] : memref<1x256xf32, #tpu.memory_space<vmem>>, vector<1x256xf32>
    %5 = vector.broadcast %4 : vector<1x256xf32> to vector<256x256xf32>
    %6 = arith.addf %3, %5 : vector<256x256xf32>
    %cst_5 = arith.constant 2.000000e-01 : f32
    %7 = vector.broadcast %cst_5 : f32 to vector<256x256xf32>
    %8 = arith.mulf %7, %6 : vector<256x256xf32>
    %9 = arith.maximumf %6, %8 : vector<256x256xf32>
    %10 = arith.truncf %9 : vector<256x256xf32> to vector<256x256xbf16>
    %c0_6 = arith.constant 0 : index
    %c0_7 = arith.constant 0 : index
    %11 = vector.load %arg4[%c0_6, %c0_7] : memref<256x128xbf16, #tpu.memory_space<vmem>>, vector<256x128xbf16>
    %cst_8 = arith.constant dense<0.000000e+00> : vector<256x128xf32>
    %12 = tpu.matmul %10, %11, %cst_8 {dimension_numbers = #tpu.dot_dimension_numbers<[1], [0], [0], [1], [0, 0, 1, 1], [], []>} : vector<256x256xbf16>, vector<256x128xbf16>, vector<256x128xf32> -> vector<256x128xf32>
    %c0_9 = arith.constant 0 : index
    %c0_10 = arith.constant 0 : index
    %13 = vector.load %arg5[%c0_9, %c0_10] : memref<1x128xf32, #tpu.memory_space<vmem>>, vector<1x128xf32>
    %14 = vector.broadcast %13 : vector<1x128xf32> to vector<256x128xf32>
    %15 = arith.addf %12, %14 : vector<256x128xf32>
    %cst_11 = arith.constant 2.000000e-01 : f32
    %16 = vector.broadcast %cst_11 : f32 to vector<256x128xf32>
    %17 = arith.mulf %16, %15 : vector<256x128xf32>
    %18 = arith.maximumf %15, %17 : vector<256x128xf32>
    %19 = arith.truncf %18 : vector<256x128xf32> to vector<256x128xbf16>
    %c0_12 = arith.constant 0 : index
    %c0_13 = arith.constant 0 : index
    %20 = vector.load %arg6[%c0_12, %c0_13] : memref<128x128xbf16, #tpu.memory_space<vmem>>, vector<128x128xbf16>
    %cst_14 = arith.constant dense<0.000000e+00> : vector<256x128xf32>
    %21 = tpu.matmul %19, %20, %cst_14 {dimension_numbers = #tpu.dot_dimension_numbers<[1], [0], [0], [1], [0, 0, 1, 1], [], []>} : vector<256x128xbf16>, vector<128x128xbf16>, vector<256x128xf32> -> vector<256x128xf32>
    %c0_15 = arith.constant 0 : index
    %c0_16 = arith.constant 0 : index
    %22 = memref.load %arg7[%c0_15, %c0_16] : memref<1x1xf32, #tpu.memory_space<smem>>
    %23 = vector.broadcast %22 : f32 to vector<256x128xf32>
    %24 = arith.addf %21, %23 : vector<256x128xf32>
    %cst_17 = arith.constant 0.000000e+00 : f32
    %25 = vector.broadcast %cst_17 : f32 to vector<256x128xf32>
    %26 = arith.subf %25, %24 : vector<256x128xf32>
    %27 = math.exp %26 : vector<256x128xf32>
    %cst_18 = arith.constant 1.000000e+00 : f32
    %28 = vector.broadcast %cst_18 : f32 to vector<256x128xf32>
    %29 = arith.addf %28, %27 : vector<256x128xf32>
    %30 = tpu.reciprocal %29 : vector<256x128xf32> -> vector<256x128xf32>
    %c0_19 = arith.constant 0 : index
    %c0_20 = arith.constant 0 : index
    %31 = vector.load %arg8[%c0_19, %c0_20] : memref<256x128xf32, #tpu.memory_space<vmem>>, vector<256x128xf32>
    tpu.vector_store %arg8[%c0_19, %c0_20], %30 {strides = array<i32>} : memref<256x128xf32, #tpu.memory_space<vmem>>, vector<256x128xf32>,
    return
  }
  func.func @transform_0(%arg0: i32) -> (i32, i32) {
    %c0_i32 = arith.constant 0 : i32
    %c0_i32_0 = arith.constant 0 : i32
    return %arg0, %c0_i32 : i32, i32
  }
  func.func @transform_1(%arg0: i32) -> (i32, i32) {
    %c0_i32 = arith.constant 0 : i32
    %c0_i32_0 = arith.constant 0 : i32
    %c0_i32_1 = arith.constant 0 : i32
    return %c0_i32, %c0_i32_0 : i32, i32
  }
  func.func @transform_2(%arg0: i32) -> (i32, i32) {
    %c0_i32 = arith.constant 0 : i32
    %c0_i32_0 = arith.constant 0 : i32
    %c0_i32_1 = arith.constant 0 : i32
    return %c0_i32, %c0_i32_0 : i32, i32
  }
  func.func @transform_3(%arg0: i32) -> (i32, i32) {
    %c0_i32 = arith.constant 0 : i32
    %c0_i32_0 = arith.constant 0 : i32
    %c0_i32_1 = arith.constant 0 : i32
    return %c0_i32, %c0_i32_0 : i32, i32
  }
  func.func @transform_4(%arg0: i32) -> (i32, i32) {
    %c0_i32 = arith.constant 0 : i32
    %c0_i32_0 = arith.constant 0 : i32
    %c0_i32_1 = arith.constant 0 : i32
    return %c0_i32, %c0_i32_0 : i32, i32
  }
  func.func @transform_5(%arg0: i32) -> (i32, i32) {
    %c0_i32 = arith.constant 0 : i32
    %c0_i32_0 = arith.constant 0 : i32
    %c0_i32_1 = arith.constant 0 : i32
    return %c0_i32, %c0_i32_0 : i32, i32
  }
  func.func @transform_6(%arg0: i32) -> (i32, i32) {
    %c0_i32 = arith.constant 0 : i32
    %c0_i32_0 = arith.constant 0 : i32
    %c0_i32_1 = arith.constant 0 : i32
    return %c0_i32, %c0_i32_0 : i32, i32
  }
  func.func @transform_7(%arg0: i32) -> (i32, i32) {
    %c0_i32 = arith.constant 0 : i32
    %c0_i32_0 = arith.constant 0 : i32
    return %arg0, %c0_i32 : i32, i32
  }
}

</mosaic_0001>

<llo_original>
// kernel: tpu_custom_call.1
$region0: #{tpu_custom_call.1}
  #allocation0 [shape = 'u32[]', space=smem, size = 0x4, offset = 0x4, fixed_abs, tag = 'smem constant byte address 0x4 - core index']
  #allocation1 [shape = 'u32[72,128]{1,0:T(1,128)}', space=vmem, size = 0x9000, scoped, tag = 'internal scratch']
  #allocation2 [shape = 'f32[1,1]{1,0:T(1,128)S(6)}', space=smem, size = 0x200, scoped, tag = 'scoped memory for tpu_custom_call.1']
  %s0 = inlined_call_operand.hbm [shape: f32[200,512], index: 0, kind: input, shape index: {}]
  %s1 = inlined_call_operand.hbm [shape: bf16[512,256], index: 1, kind: input, shape index: {}]
  %s2 = inlined_call_operand.vmem [shape: f32[1,256], index: 2, kind: input, shape index: {}]
  %s3 = inlined_call_operand.hbm [shape: bf16[256,128], index: 3, kind: input, shape index: {}]
  %s4 = inlined_call_operand.vmem [shape: f32[1,128], index: 4, kind: input, shape index: {}]
  %s5 = inlined_call_operand.hbm [shape: bf16[128,128], index: 5, kind: input, shape index: {}]
  %s6 = inlined_call_operand.<no memory space> [shape: f32[1,1], index: 6, kind: input, shape index: {}]
  %s7 = inlined_call_operand.hbm [shape: f32[200,128], index: 7, kind: output, shape index: {}]
  %s8 = sld [smem:[#allocation0]]
  $region54: #{tpu_custom_call.1} parent=0
    _
  %s10 = ssub.s32 1, %s8
  %s11 = scalar_select 0, %s10, %s8
  %12 = sst [smem:[#allocation2]] %s6
  $region1: #{tpu_custom_call.1} parent=0
    #allocation3 [shape = 'u8[524288]{0}', space=vmem, size = 0x80000, scoped, tag = 'input window, operand 0, single buffered']
    #allocation4 [shape = 's32[1]{0}', space=sflag, size = 0x4, scoped, tag = 'scoped memory for tpu_custom_call.1']
    #allocation5 [shape = 's32[1]{0}', space=sflag, size = 0x4, scoped, tag = 'scoped memory for tpu_custom_call.1']
    #allocation6 [shape = 'u8[262144]{0}', space=vmem, size = 0x40000, scoped, tag = 'input window, operand 1, single buffered']
    #allocation7 [shape = 's32[1]{0}', space=sflag, size = 0x4, scoped, tag = 'scoped memory for tpu_custom_call.1']
    #allocation8 [shape = 'u8[65536]{0}', space=vmem, size = 0x10000, scoped, tag = 'input window, operand 3, single buffered']
    #allocation9 [shape = 'u8[32768]{0}', space=vmem, size = 0x8000, scoped, tag = 'input window, operand 5, single buffered']
    #allocation10 [shape = 's32[1]{0}', space=sflag, size = 0x4, scoped, tag = 'scoped memory for tpu_custom_call.1']
    #allocation11 [shape = 'u8[131072]{0}', space=vmem, size = 0x20000, scoped, tag = 'output window, operand 0, single buffered']
    %13 = vsyncpa [#allocation4], 0
    %14 = vsyncpa [#allocation7], 0
    %15 = vsyncpa [#allocation10], 0
    %16 = vsyncpa [#allocation5], 0
    // Predicated region
    $region2: #{tpu_custom_call.1} parent=1 // pred_check
      _
    $region3: #{tpu_custom_call.1} parent=1 // pred_check_branch
      %18 = sbr.rel (0) target = $region5
    $region4: #{tpu_custom_call.1} parent=1 // pred_region
      %20 = vsyncadd [#allocation4], 3584
      %s21 = sshll.u32 %s0, 4
      %s22 = int_to_ptr.hbm [resolvable:$true] %s21
      %s23 = sshll.u32 [#allocation3], 4
      %s24 = int_to_ptr.vmem [resolvable:$true] %s23
      %29 = dma.hbm_to_vmem [thread:$0]  %s22, 12800, %s24, [#allocation4], 512, 512, 32
    $region5: #{tpu_custom_call.1} parent=1 // pred_fallthru
      _
    // Predicated region
    $region6: #{tpu_custom_call.1} parent=1 // pred_check
      _
    $region7: #{tpu_custom_call.1} parent=1 // pred_check_branch
      %31 = sbr.rel (0) target = $region9
    $region8: #{tpu_custom_call.1} parent=1 // pred_region
      %33 = vsyncadd [#allocation7], 0
      %s34 = sshll.u32 %s1, 4
      %s35 = int_to_ptr.hbm [resolvable:$true] %s34
      %s36 = sshll.u32 [#allocation6], 4
      %s37 = int_to_ptr.vmem [resolvable:$true] %s36
      %42 = dma.hbm_to_vmem [thread:$0]  %s35, 8192, %s37, [#allocation7], 128, 128, 8
    $region9: #{tpu_custom_call.1} parent=1 // pred_fallthru
      _
    // Predicated region
    $region10: #{tpu_custom_call.1} parent=1 // pred_check
      _
    $region11: #{tpu_custom_call.1} parent=1 // pred_check_branch
      %44 = sbr.rel (0) target = $region13
    $region12: #{tpu_custom_call.1} parent=1 // pred_region
      _
    $region13: #{tpu_custom_call.1} parent=1 // pred_fallthru
      _
    // Predicated region
    $region14: #{tpu_custom_call.1} parent=1 // pred_check
      _
    $region15: #{tpu_custom_call.1} parent=1 // pred_check_branch
      %46 = sbr.rel (0) target = $region17
    $region16: #{tpu_custom_call.1} parent=1 // pred_region
      %48 = vsyncadd [#allocation7], 0
      %s49 = sshll.u32 %s3, 4
      %s50 = int_to_ptr.hbm [resolvable:$true] %s49
      %s51 = sshll.u32 [#allocation8], 4
      %s52 = int_to_ptr.vmem [resolvable:$true] %s51
      %57 = dma.hbm_to_vmem [thread:$0]  %s50, 2048, %s52, [#allocation7], 64, 64, 4
    $region17: #{tpu_custom_call.1} parent=1 // pred_fallthru
      _
    // Predicated region
    $region18: #{tpu_custom_call.1} parent=1 // pred_check
      _
    $region19: #{tpu_custom_call.1} parent=1 // pred_check_branch
      %59 = sbr.rel (0) target = $region21
    $region20: #{tpu_custom_call.1} parent=1 // pred_region
      _
    $region21: #{tpu_custom_call.1} parent=1 // pred_fallthru
      _
    // Predicated region
    $region22: #{tpu_custom_call.1} parent=1 // pred_check
      _
    $region23: #{tpu_custom_call.1} parent=1 // pred_check_branch
      %61 = sbr.rel (0) target = $region25
    $region24: #{tpu_custom_call.1} parent=1 // pred_region
      %63 = vsyncadd [#allocation10], 0
      %s64 = sshll.u32 %s5, 4
      %s65 = int_to_ptr.hbm [resolvable:$true] %s64
      %s66 = sshll.u32 [#allocation9], 4
      %s67 = int_to_ptr.vmem [resolvable:$true] %s66
      %72 = dma.hbm_to_vmem [thread:$0]  %s65, 1024, %s67, [#allocation10], 64, 64, 4
    $region25: #{tpu_custom_call.1} parent=1 // pred_fallthru
      _
    // Predicated region
    $region26: #{tpu_custom_call.1} parent=1 // pred_check
      _
    $region27: #{tpu_custom_call.1} parent=1 // pred_check_branch
      %74 = sbr.rel (0) target = $region29
    $region28: #{tpu_custom_call.1} parent=1 // pred_region
      _
    $region29: #{tpu_custom_call.1} parent=1 // pred_fallthru
      _
    // Predicated region
    $region30: #{tpu_custom_call.1} parent=1 // pred_check
      _
    $region31: #{tpu_custom_call.1} parent=1 // pred_check_branch
      %76 = sbr.rel (0) target = $region33
    $region32: #{tpu_custom_call.1} parent=1 // pred_region
      %78 = dma.done [#allocation4], 16384
    $region33: #{tpu_custom_call.1} parent=1 // pred_fallthru
      _
    // Predicated region
    $region34: #{tpu_custom_call.1} parent=1 // pred_check
      _
    $region35: #{tpu_custom_call.1} parent=1 // pred_check_branch
      %80 = sbr.rel (0) target = $region37
    $region36: #{tpu_custom_call.1} parent=1 // pred_region
      %82 = dma.done [#allocation7], 8192
    $region37: #{tpu_custom_call.1} parent=1 // pred_fallthru
      _
    // Predicated region
    $region38: #{tpu_custom_call.1} parent=1 // pred_check
      _
    $region39: #{tpu_custom_call.1} parent=1 // pred_check_branch
      %84 = sbr.rel (0) target = $region41
    $region40: #{tpu_custom_call.1} parent=1 // pred_region
      %86 = dma.done [#allocation7], 2048
    $region41: #{tpu_custom_call.1} parent=1 // pred_fallthru
      _
    // Predicated region
    $region42: #{tpu_custom_call.1} parent=1 // pred_check
      _
    $region43: #{tpu_custom_call.1} parent=1 // pred_check_branch
      %88 = sbr.rel (0) target = $region45
    $region44: #{tpu_custom_call.1} parent=1 // pred_region
      %90 = dma.done [#allocation10], 1024
    $region45: #{tpu_custom_call.1} parent=1 // pred_fallthru
      _
    %v91 = vld [vmem:[#allocation3] sm:$0xff]
    %v92 = vld [vmem:[#allocation3 + $0x8] sm:$0xff]
    %v93 = vld [vmem:[#allocation3 + $0x10] sm:$0xff]
    %v94 = vld [vmem:[#allocation3 + $0x18] sm:$0xff]
    %v95 = vld [vmem:[#allocation3 + $0x20] sm:$0xff]
    %v96 = vld [vmem:[#allocation3 + $0x28] sm:$0xff]
    %v97 = vld [vmem:[#allocation3 + $0x30] sm:$0xff]
    %v98 = vld [vmem:[#allocation3 + $0x38] sm:$0xff]
    %v99 = vld [vmem:[#allocation3 + $0x40] sm:$0xff]
    %v100 = vld [vmem:[#allocation3 + $0x48] sm:$0xff]
    %v101 = vld [vmem:[#allocation3 + $0x50] sm:$0xff]
    %v102 = vld [vmem:[#allocation3 + $0x58] sm:$0xff]
    %v103 = vld [vmem:[#allocation3 + $0x60] sm:$0xff]
    %v104 = vld [vmem:[#allocation3 + $0x68] sm:$0xff]
    %v105 = vld [vmem:[#allocation3 + $0x70] sm:$0xff]
    %v106 = vld [vmem:[#allocation3 + $0x78] sm:$0xff]
    %v107 = vld [vmem:[#allocation3 + $0x80] sm:$0xff]
    %v108 = vld [vmem:[#allocation3 + $0x88] sm:$0xff]
    %v109 = vld [vmem:[#allocation3 + $0x90] sm:$0xff]
    %v110 = vld [vmem:[#allocation3 + $0x98] sm:$0xff]
    %v111 = vld [vmem:[#allocation3 + $0xa0] sm:$0xff]
    %v112 = vld [vmem:[#allocation3 + $0xa8] sm:$0xff]
    %v113 = vld [vmem:[#allocation3 + $0xb0] sm:$0xff]
    %v114 = vld [vmem:[#allocation3 + $0xb8] sm:$0xff]
    %v115 = vld [vmem:[#allocation3 + $0xc0] sm:$0xff]
    %v116 = vld [vmem:[#allocation3 + $0xc8] sm:$0xff]
    %v117 = vld [vmem:[#allocation3 + $0xd0] sm:$0xff]
    %v118 = vld [vmem:[#allocation3 + $0xd8] sm:$0xff]
    %v119 = vld [vmem:[#allocation3 + $0xe0] sm:$0xff]
    %v120 = vld [vmem:[#allocation3 + $0xe8] sm:$0xff]
    %v121 = vld [vmem:[#allocation3 + $0xf0] sm:$0xff]
    %v122 = vld [vmem:[#allocation3 + $0xf8] sm:$0xff]
    %v123 = vld [vmem:[#allocation3 + $0x100] sm:$0xff]
    %v124 = vld [vmem:[#allocation3 + $0x108] sm:$0xff]
    %v125 = vld [vmem:[#allocation3 + $0x110] sm:$0xff]
    %v126 = vld [vmem:[#allocation3 + $0x118] sm:$0xff]
    %v127 = vld [vmem:[#allocation3 + $0x120] sm:$0xff]
    %v128 = vld [vmem:[#allocation3 + $0x128] sm:$0xff]
    %v129 = vld [vmem:[#allocation3 + $0x130] sm:$0xff]
    %v130 = vld [vmem:[#allocation3 + $0x138] sm:$0xff]
    %v131 = vld [vmem:[#allocation3 + $0x140] sm:$0xff]
    %v132 = vld [vmem:[#allocation3 + $0x148] sm:$0xff]
    %v133 = vld [vmem:[#allocation3 + $0x150] sm:$0xff]
    %v134 = vld [vmem:[#allocation3 + $0x158] sm:$0xff]
    %v135 = vld [vmem:[#allocation3 + $0x160] sm:$0xff]
    %v136 = vld [vmem:[#allocation3 + $0x168] sm:$0xff]
    %v137 = vld [vmem:[#allocation3 + $0x170] sm:$0xff]
    %v138 = vld [vmem:[#allocation3 + $0x178] sm:$0xff]
    %v139 = vld [vmem:[#allocation3 + $0x180] sm:$0xff]
    %v140 = vld [vmem:[#allocation3 + $0x188] sm:$0xff]
    %v141 = vld [vmem:[#allocation3 + $0x190] sm:$0xff]
    %v142 = vld [vmem:[#allocation3 + $0x198] sm:$0xff]
    %v143 = vld [vmem:[#allocation3 + $0x1a0] sm:$0xff]
    %v144 = vld [vmem:[#allocation3 + $0x1a8] sm:$0xff]
    %v145 = vld [vmem:[#allocation3 + $0x1b0] sm:$0xff]
    %v146 = vld [vmem:[#allocation3 + $0x1b8] sm:$0xff]
    %v147 = vld [vmem:[#allocation3 + $0x1c0] sm:$0xff]
    %v148 = vld [vmem:[#allocation3 + $0x1c8] sm:$0xff]
    %v149 = vld [vmem:[#allocation3 + $0x1d0] sm:$0xff]
    %v150 = vld [vmem:[#allocation3 + $0x1d8] sm:$0xff]
    %v151 = vld [vmem:[#allocation3 + $0x1e0] sm:$0xff]
    %v152 = vld [vmem:[#allocation3 + $0x1e8] sm:$0xff]
    %v153 = vld [vmem:[#allocation3 + $0x1f0] sm:$0xff]
    %v154 = vld [vmem:[#allocation3 + $0x1f8] sm:$0xff]
    %v155 = vld [vmem:[#allocation3 + $0x200] sm:$0xff]
    %v156 = vld [vmem:[#allocation3 + $0x208] sm:$0xff]
    %v157 = vld [vmem:[#allocation3 + $0x210] sm:$0xff]
    %v158 = vld [vmem:[#allocation3 + $0x218] sm:$0xff]
    %v159 = vld [vmem:[#allocation3 + $0x220] sm:$0xff]
    %v160 = vld [vmem:[#allocation3 + $0x228] sm:$0xff]
    %v161 = vld [vmem:[#allocation3 + $0x230] sm:$0xff]
    %v162 = vld [vmem:[#allocation3 + $0x238] sm:$0xff]
    %v163 = vld [vmem:[#allocation3 + $0x240] sm:$0xff]
    %v164 = vld [vmem:[#allocation3 + $0x248] sm:$0xff]
    %v165 = vld [vmem:[#allocation3 + $0x250] sm:$0xff]
    %v166 = vld [vmem:[#allocation3 + $0x258] sm:$0xff]
    %v167 = vld [vmem:[#allocation3 + $0x260] sm:$0xff]
    %v168 = vld [vmem:[#allocation3 + $0x268] sm:$0xff]
    %v169 = vld [vmem:[#allocation3 + $0x270] sm:$0xff]
    %v170 = vld [vmem:[#allocation3 + $0x278] sm:$0xff]
    %v171 = vld [vmem:[#allocation3 + $0x280] sm:$0xff]
    %v172 = vld [vmem:[#allocation3 + $0x288] sm:$0xff]
    %v173 = vld [vmem:[#allocation3 + $0x290] sm:$0xff]
    %v174 = vld [vmem:[#allocation3 + $0x298] sm:$0xff]
    %v175 = vld [vmem:[#allocation3 + $0x2a0] sm:$0xff]
    %v176 = vld [vmem:[#allocation3 + $0x2a8] sm:$0xff]
    %v177 = vld [vmem:[#allocation3 + $0x2b0] sm:$0xff]
    %v178 = vld [vmem:[#allocation3 + $0x2b8] sm:$0xff]
    %v179 = vld [vmem:[#allocation3 + $0x2c0] sm:$0xff]
    %v180 = vld [vmem:[#allocation3 + $0x2c8] sm:$0xff]
    %v181 = vld [vmem:[#allocation3 + $0x2d0] sm:$0xff]
    %v182 = vld [vmem:[#allocation3 + $0x2d8] sm:$0xff]
    %v183 = vld [vmem:[#allocation3 + $0x2e0] sm:$0xff]
    %v184 = vld [vmem:[#allocation3 + $0x2e8] sm:$0xff]
    %v185 = vld [vmem:[#allocation3 + $0x2f0] sm:$0xff]
    %v186 = vld [vmem:[#allocation3 + $0x2f8] sm:$0xff]
    %v187 = vld [vmem:[#allocation3 + $0x300] sm:$0xff]
    %v188 = vld [vmem:[#allocation3 + $0x308] sm:$0xff]
    %v189 = vld [vmem:[#allocation3 + $0x310] sm:$0xff]
    %v190 = vld [vmem:[#allocation3 + $0x318] sm:$0xff]
    %v191 = vld [vmem:[#allocation3 + $0x320] sm:$0xff]
    %v192 = vld [vmem:[#allocation3 + $0x328] sm:$0xff]
    %v193 = vld [vmem:[#allocation3 + $0x330] sm:$0xff]
    %v194 = vld [vmem:[#allocation3 + $0x338] sm:$0xff]
    %v195 = vld [vmem:[#allocation3 + $0x340] sm:$0xff]
    %v196 = vld [vmem:[#allocation3 + $0x348] sm:$0xff]
    %v197 = vld [vmem:[#allocation3 + $0x350] sm:$0xff]
    %v198 = vld [vmem:[#allocation3 + $0x358] sm:$0xff]
    %v199 = vld [vmem:[#allocation3 + $0x360] sm:$0xff]
    %v200 = vld [vmem:[#allocation3 + $0x368] sm:$0xff]
    %v201 = vld [vmem:[#allocation3 + $0x370] sm:$0xff]
    %v202 = vld [vmem:[#allocation3 + $0x378] sm:$0xff]
    %v203 = vld [vmem:[#allocation3 + $0x380] sm:$0xff]
    %v204 = vld [vmem:[#allocation3 + $0x388] sm:$0xff]
    %v205 = vld [vmem:[#allocation3 + $0x390] sm:$0xff]
    %v206 = vld [vmem:[#allocation3 + $0x398] sm:$0xff]
    %v207 = vld [vmem:[#allocation3 + $0x3a0] sm:$0xff]
    %v208 = vld [vmem:[#allocation3 + $0x3a8] sm:$0xff]
    %v209 = vld [vmem:[#allocation3 + $0x3b0] sm:$0xff]
    %v210 = vld [vmem:[#allocation3 + $0x3b8] sm:$0xff]
    %v211 = vld [vmem:[#allocation3 + $0x3c0] sm:$0xff]
    %v212 = vld [vmem:[#allocation3 + $0x3c8] sm:$0xff]
    %v213 = vld [vmem:[#allocation3 + $0x3d0] sm:$0xff]
    %v214 = vld [vmem:[#allocation3 + $0x3d8] sm:$0xff]
    %v215 = vld [vmem:[#allocation3 + $0x3e0] sm:$0xff]
    %v216 = vld [vmem:[#allocation3 + $0x3e8] sm:$0xff]
    %v217 = vld [vmem:[#allocation3 + $0x3f0] sm:$0xff]
    %v218 = vld [vmem:[#allocation3 + $0x3f8] sm:$0xff]
    %v219 = vpack.c.bf16 %v95, %v91
    %v220 = vpack.c.bf16 %v96, %v92
    %v221 = vpack.c.bf16 %v97, %v93
    %v222 = vpack.c.bf16 %v98, %v94
    %v223 = vpack.c.bf16 %v103, %v99
    %v224 = vpack.c.bf16 %v104, %v100
    %v225 = vpack.c.bf16 %v105, %v101
    %v226 = vpack.c.bf16 %v106, %v102
    %v227 = vpack.c.bf16 %v111, %v107
    %v228 = vpack.c.bf16 %v112, %v108
    %v229 = vpack.c.bf16 %v113, %v109
    %v230 = vpack.c.bf16 %v114, %v110
    %v231 = vpack.c.bf16 %v119, %v115
    %v232 = vpack.c.bf16 %v120, %v116
    %v233 = vpack.c.bf16 %v121, %v117
    %v234 = vpack.c.bf16 %v122, %v118
    %v235 = vpack.c.bf16 %v127, %v123
    %v236 = vpack.c.bf16 %v128, %v124
    %v237 = vpack.c.bf16 %v129, %v125
    %v238 = vpack.c.bf16 %v130, %v126
    %v239 = vpack.c.bf16 %v135, %v131
    %v240 = vpack.c.bf16 %v136, %v132
    %v241 = vpack.c.bf16 %v137, %v133
    %v242 = vpack.c.bf16 %v138, %v134
    %v243 = vpack.c.bf16 %v143, %v139
    %v244 = vpack.c.bf16 %v144, %v140
    %v245 = vpack.c.bf16 %v145, %v141
    %v246 = vpack.c.bf16 %v146, %v142
    %v247 = vpack.c.bf16 %v151, %v147
    %v248 = vpack.c.bf16 %v152, %v148
    %v249 = vpack.c.bf16 %v153, %v149
    %v250 = vpack.c.bf16 %v154, %v150
    %v251 = vpack.c.bf16 %v159, %v155
    %v252 = vpack.c.bf16 %v160, %v156
    %v253 = vpack.c.bf16 %v161, %v157
    %v254 = vpack.c.bf16 %v162, %v158
    %v255 = vpack.c.bf16 %v167, %v163
    %v256 = vpack.c.bf16 %v168, %v164
    %v257 = vpack.c.bf16 %v169, %v165
    %v258 = vpack.c.bf16 %v170, %v166
    %v259 = vpack.c.bf16 %v175, %v171
    %v260 = vpack.c.bf16 %v176, %v172
    %v261 = vpack.c.bf16 %v177, %v173
    %v262 = vpack.c.bf16 %v178, %v174
    %v263 = vpack.c.bf16 %v183, %v179
    %v264 = vpack.c.bf16 %v184, %v180
    %v265 = vpack.c.bf16 %v185, %v181
    %v266 = vpack.c.bf16 %v186, %v182
    %v267 = vpack.c.bf16 %v191, %v187
    %v268 = vpack.c.bf16 %v192, %v188
    %v269 = vpack.c.bf16 %v193, %v189
    %v270 = vpack.c.bf16 %v194, %v190
    %v271 = vpack.c.bf16 %v199, %v195
    %v272 = vpack.c.bf16 %v200, %v196
    %v273 = vpack.c.bf16 %v201, %v197
    %v274 = vpack.c.bf16 %v202, %v198
    %v275 = vpack.c.bf16 %v207, %v203
    %v276 = vpack.c.bf16 %v208, %v204
    %v277 = vpack.c.bf16 %v209, %v205
    %v278 = vpack.c.bf16 %v210, %v206
    %v279 = vpack.c.bf16 %v215, %v211
    %v280 = vpack.c.bf16 %v216, %v212
    %v281 = vpack.c.bf16 %v217, %v213
    %v282 = vpack.c.bf16 %v218, %v214
    %v283 = vld [vmem:[#allocation6] sm:$0xff]
    %v284 = vld [vmem:[#allocation6 + $0x8] sm:$0xff]
    %v285 = vld [vmem:[#allocation6 + $0x10] sm:$0xff]
    %v286 = vld [vmem:[#allocation6 + $0x18] sm:$0xff]
    %v287 = vld [vmem:[#allocation6 + $0x20] sm:$0xff]
    %v288 = vld [vmem:[#allocation6 + $0x28] sm:$0xff]
    %v289 = vld [vmem:[#allocation6 + $0x30] sm:$0xff]
    %v290 = vld [vmem:[#allocation6 + $0x38] sm:$0xff]
    %v291 = vld [vmem:[#allocation6 + $0x40] sm:$0xff]
    %v292 = vld [vmem:[#allocation6 + $0x48] sm:$0xff]
    %v293 = vld [vmem:[#allocation6 + $0x50] sm:$0xff]
    %v294 = vld [vmem:[#allocation6 + $0x58] sm:$0xff]
    %v295 = vld [vmem:[#allocation6 + $0x60] sm:$0xff]
    %v296 = vld [vmem:[#allocation6 + $0x68] sm:$0xff]
    %v297 = vld [vmem:[#allocation6 + $0x70] sm:$0xff]
    %v298 = vld [vmem:[#allocation6 + $0x78] sm:$0xff]
    %v299 = vld [vmem:[#allocation6 + $0x80] sm:$0xff]
    %v300 = vld [vmem:[#allocation6 + $0x88] sm:$0xff]
    %v301 = vld [vmem:[#allocation6 + $0x90] sm:$0xff]
    %v302 = vld [vmem:[#allocation6 + $0x98] sm:$0xff]
    %v303 = vld [vmem:[#allocation6 + $0xa0] sm:$0xff]
    %v304 = vld [vmem:[#allocation6 + $0xa8] sm:$0xff]
    %v305 = vld [vmem:[#allocation6 + $0xb0] sm:$0xff]
    %v306 = vld [vmem:[#allocation6 + $0xb8] sm:$0xff]
    %v307 = vld [vmem:[#allocation6 + $0xc0] sm:$0xff]
    %v308 = vld [vmem:[#allocation6 + $0xc8] sm:$0xff]
    %v309 = vld [vmem:[#allocation6 + $0xd0] sm:$0xff]
    %v310 = vld [vmem:[#allocation6 + $0xd8] sm:$0xff]
    %v311 = vld [vmem:[#allocation6 + $0xe0] sm:$0xff]
    %v312 = vld [vmem:[#allocation6 + $0xe8] sm:$0xff]
    %v313 = vld [vmem:[#allocation6 + $0xf0] sm:$0xff]
    %v314 = vld [vmem:[#allocation6 + $0xf8] sm:$0xff]
    %v315 = vld [vmem:[#allocation6 + $0x100] sm:$0xff]
    %v316 = vld [vmem:[#allocation6 + $0x108] sm:$0xff]
    %v317 = vld [vmem:[#allocation6 + $0x110] sm:$0xff]
    %v318 = vld [vmem:[#allocation6 + $0x118] sm:$0xff]
    %v319 = vld [vmem:[#allocation6 + $0x120] sm:$0xff]
    %v320 = vld [vmem:[#allocation6 + $0x128] sm:$0xff]
    %v321 = vld [vmem:[#allocation6 + $0x130] sm:$0xff]
    %v322 = vld [vmem:[#allocation6 + $0x138] sm:$0xff]
    %v323 = vld [vmem:[#allocation6 + $0x140] sm:$0xff]
    %v324 = vld [vmem:[#allocation6 + $0x148] sm:$0xff]
    %v325 = vld [vmem:[#allocation6 + $0x150] sm:$0xff]
    %v326 = vld [vmem:[#allocation6 + $0x158] sm:$0xff]
    %v327 = vld [vmem:[#allocation6 + $0x160] sm:$0xff]
    %v328 = vld [vmem:[#allocation6 + $0x168] sm:$0xff]
    %v329 = vld [vmem:[#allocation6 + $0x170] sm:$0xff]
    %v330 = vld [vmem:[#allocation6 + $0x178] sm:$0xff]
    %v331 = vld [vmem:[#allocation6 + $0x180] sm:$0xff]
    %v332 = vld [vmem:[#allocation6 + $0x188] sm:$0xff]
    %v333 = vld [vmem:[#allocation6 + $0x190] sm:$0xff]
    %v334 = vld [vmem:[#allocation6 + $0x198] sm:$0xff]
    %v335 = vld [vmem:[#allocation6 + $0x1a0] sm:$0xff]
    %v336 = vld [vmem:[#allocation6 + $0x1a8] sm:$0xff]
    %v337 = vld [vmem:[#allocation6 + $0x1b0] sm:$0xff]
    %v338 = vld [vmem:[#allocation6 + $0x1b8] sm:$0xff]
    %v339 = vld [vmem:[#allocation6 + $0x1c0] sm:$0xff]
    %v340 = vld [vmem:[#allocation6 + $0x1c8] sm:$0xff]
    %v341 = vld [vmem:[#allocation6 + $0x1d0] sm:$0xff]
    %v342 = vld [vmem:[#allocation6 + $0x1d8] sm:$0xff]
    %v343 = vld [vmem:[#allocation6 + $0x1e0] sm:$0xff]
    %v344 = vld [vmem:[#allocation6 + $0x1e8] sm:$0xff]
    %v345 = vld [vmem:[#allocation6 + $0x1f0] sm:$0xff]
    %v346 = vld [vmem:[#allocation6 + $0x1f8] sm:$0xff]
    %v347 = vld [vmem:[%s2] sm:$0x3]
    %v349 = vperm.slane %v347, 0
    %v350 = vperm.slane %v347, 1
    %v417 = vunpack.c.l.b16 %v283
    %v418 = vunpack.c.h.b16 %v283
    %v419 = vunpack.c.l.b16 %v284
    %v420 = vunpack.c.h.b16 %v284
    %v421 = vunpack.c.l.b16 %v285
    %v422 = vunpack.c.h.b16 %v285
    %v423 = vunpack.c.l.b16 %v286
    %v424 = vunpack.c.h.b16 %v286
    %v425 = vunpack.c.l.b16 %v287
    %v426 = vunpack.c.h.b16 %v287
    %v427 = vunpack.c.l.b16 %v288
    %v428 = vunpack.c.h.b16 %v288
    %v429 = vunpack.c.l.b16 %v289
    %v430 = vunpack.c.h.b16 %v289
    %v431 = vunpack.c.l.b16 %v290
    %v432 = vunpack.c.h.b16 %v290
    %v433 = vunpack.c.l.b16 %v291
    %v434 = vunpack.c.h.b16 %v291
    %v435 = vunpack.c.l.b16 %v292
    %v436 = vunpack.c.h.b16 %v292
    %v437 = vunpack.c.l.b16 %v293
    %v438 = vunpack.c.h.b16 %v293
    %v439 = vunpack.c.l.b16 %v294
    %v440 = vunpack.c.h.b16 %v294
    %v441 = vunpack.c.l.b16 %v295
    %v442 = vunpack.c.h.b16 %v295
    %v443 = vunpack.c.l.b16 %v296
    %v444 = vunpack.c.h.b16 %v296
    %v445 = vunpack.c.l.b16 %v297
    %v446 = vunpack.c.h.b16 %v297
    %v447 = vunpack.c.l.b16 %v298
    %v448 = vunpack.c.h.b16 %v298
    %v449 = vunpack.c.l.b16 %v299
    %v450 = vunpack.c.h.b16 %v299
    %v451 = vunpack.c.l.b16 %v300
    %v452 = vunpack.c.h.b16 %v300
    %v453 = vunpack.c.l.b16 %v301
    %v454 = vunpack.c.h.b16 %v301
    %v455 = vunpack.c.l.b16 %v302
    %v456 = vunpack.c.h.b16 %v302
    %v457 = vunpack.c.l.b16 %v303
    %v458 = vunpack.c.h.b16 %v303
    %v459 = vunpack.c.l.b16 %v304
    %v460 = vunpack.c.h.b16 %v304
    %v461 = vunpack.c.l.b16 %v305
    %v462 = vunpack.c.h.b16 %v305
    %v463 = vunpack.c.l.b16 %v306
    %v464 = vunpack.c.h.b16 %v306
    %v465 = vunpack.c.l.b16 %v307
    %v466 = vunpack.c.h.b16 %v307
    %v467 = vunpack.c.l.b16 %v308
    %v468 = vunpack.c.h.b16 %v308
    %v469 = vunpack.c.l.b16 %v309
    %v470 = vunpack.c.h.b16 %v309
    %v471 = vunpack.c.l.b16 %v310
    %v472 = vunpack.c.h.b16 %v310
    %v473 = vunpack.c.l.b16 %v311
    %v474 = vunpack.c.h.b16 %v311
    %v475 = vunpack.c.l.b16 %v312
    %v476 = vunpack.c.h.b16 %v312
    %v477 = vunpack.c.l.b16 %v313
    %v478 = vunpack.c.h.b16 %v313
    %v479 = vunpack.c.l.b16 %v314
    %v480 = vunpack.c.h.b16 %v314
    %v481 = vunpack.c.l.b16 %v315
    %v482 = vunpack.c.h.b16 %v315
    %v483 = vunpack.c.l.b16 %v316
    %v484 = vunpack.c.h.b16 %v316
    %v485 = vunpack.c.l.b16 %v317
    %v486 = vunpack.c.h.b16 %v317
    %v487 = vunpack.c.l.b16 %v318
    %v488 = vunpack.c.h.b16 %v318
    %v489 = vunpack.c.l.b16 %v319
    %v490 = vunpack.c.h.b16 %v319
    %v491 = vunpack.c.l.b16 %v320
    %v492 = vunpack.c.h.b16 %v320
    %v493 = vunpack.c.l.b16 %v321
    %v494 = vunpack.c.h.b16 %v321
    %v495 = vunpack.c.l.b16 %v322
    %v496 = vunpack.c.h.b16 %v322
    %v497 = vunpack.c.l.b16 %v323
    %v498 = vunpack.c.h.b16 %v323
    %v499 = vunpack.c.l.b16 %v324
    %v500 = vunpack.c.h.b16 %v324
    %v501 = vunpack.c.l.b16 %v325
    %v502 = vunpack.c.h.b16 %v325
    %v503 = vunpack.c.l.b16 %v326
    %v504 = vunpack.c.h.b16 %v326
    %v505 = vunpack.c.l.b16 %v327
    %v506 = vunpack.c.h.b16 %v327
    %v507 = vunpack.c.l.b16 %v328
    %v508 = vunpack.c.h.b16 %v328
    %v509 = vunpack.c.l.b16 %v329
    %v510 = vunpack.c.h.b16 %v329
    %v511 = vunpack.c.l.b16 %v330
    %v512 = vunpack.c.h.b16 %v330
    %v513 = vunpack.c.l.b16 %v331
    %v514 = vunpack.c.h.b16 %v331
    %v515 = vunpack.c.l.b16 %v332
    %v516 = vunpack.c.h.b16 %v332
    %v517 = vunpack.c.l.b16 %v333
    %v518 = vunpack.c.h.b16 %v333
    %v519 = vunpack.c.l.b16 %v334
    %v520 = vunpack.c.h.b16 %v334
    %v521 = vunpack.c.l.b16 %v335
    %v522 = vunpack.c.h.b16 %v335
    %v523 = vunpack.c.l.b16 %v336
    %v524 = vunpack.c.h.b16 %v336
    %v525 = vunpack.c.l.b16 %v337
    %v526 = vunpack.c.h.b16 %v337
    %v527 = vunpack.c.l.b16 %v338
    %v528 = vunpack.c.h.b16 %v338
    %v529 = vunpack.c.l.b16 %v339
    %v530 = vunpack.c.h.b16 %v339
    %v531 = vunpack.c.l.b16 %v340
    %v532 = vunpack.c.h.b16 %v340
    %v533 = vunpack.c.l.b16 %v341
    %v534 = vunpack.c.h.b16 %v341
    %v535 = vunpack.c.l.b16 %v342
    %v536 = vunpack.c.h.b16 %v342
    %v537 = vunpack.c.l.b16 %v343
    %v538 = vunpack.c.h.b16 %v343
    %v539 = vunpack.c.l.b16 %v344
    %v540 = vunpack.c.h.b16 %v344
    %v541 = vunpack.c.l.b16 %v345
    %v542 = vunpack.c.h.b16 %v345
    %v543 = vunpack.c.l.b16 %v346
    %v544 = vunpack.c.h.b16 %v346
    %v545 = vpack.c.b16 %v419, %v417
    %v546 = vpack.c.b16 %v420, %v418
    %v547 = vpack.c.b16 %v423, %v421
    %v548 = vpack.c.b16 %v424, %v422
    %v549 = vpack.c.b16 %v427, %v425
    %v550 = vpack.c.b16 %v428, %v426
    %v551 = vpack.c.b16 %v431, %v429
    %v552 = vpack.c.b16 %v432, %v430
    %v553 = vpack.c.b16 %v435, %v433
    %v554 = vpack.c.b16 %v436, %v434
    %v555 = vpack.c.b16 %v439, %v437
    %v556 = vpack.c.b16 %v440, %v438
    %v557 = vpack.c.b16 %v443, %v441
    %v558 = vpack.c.b16 %v444, %v442
    %v559 = vpack.c.b16 %v447, %v445
    %v560 = vpack.c.b16 %v448, %v446
    %v561 = vpack.c.b16 %v451, %v449
    %v562 = vpack.c.b16 %v452, %v450
    %v563 = vpack.c.b16 %v455, %v453
    %v564 = vpack.c.b16 %v456, %v454
    %v565 = vpack.c.b16 %v459, %v457
    %v566 = vpack.c.b16 %v460, %v458
    %v567 = vpack.c.b16 %v463, %v461
    %v568 = vpack.c.b16 %v464, %v462
    %v569 = vpack.c.b16 %v467, %v465
    %v570 = vpack.c.b16 %v468, %v466
    %v571 = vpack.c.b16 %v471, %v469
    %v572 = vpack.c.b16 %v472, %v470
    %v573 = vpack.c.b16 %v475, %v473
    %v574 = vpack.c.b16 %v476, %v474
    %v575 = vpack.c.b16 %v479, %v477
    %v576 = vpack.c.b16 %v480, %v478
    %v577 = vpack.c.b16 %v483, %v481
    %v578 = vpack.c.b16 %v484, %v482
    %v579 = vpack.c.b16 %v487, %v485
    %v580 = vpack.c.b16 %v488, %v486
    %v581 = vpack.c.b16 %v491, %v489
    %v582 = vpack.c.b16 %v492, %v490
    %v583 = vpack.c.b16 %v495, %v493
    %v584 = vpack.c.b16 %v496, %v494
    %v585 = vpack.c.b16 %v499, %v497
    %v586 = vpack.c.b16 %v500, %v498
    %v587 = vpack.c.b16 %v503, %v501
    %v588 = vpack.c.b16 %v504, %v502
    %v589 = vpack.c.b16 %v507, %v505
    %v590 = vpack.c.b16 %v508, %v506
    %v591 = vpack.c.b16 %v511, %v509
    %v592 = vpack.c.b16 %v512, %v510
    %v593 = vpack.c.b16 %v515, %v513
    %v594 = vpack.c.b16 %v516, %v514
    %v595 = vpack.c.b16 %v519, %v517
    %v596 = vpack.c.b16 %v520, %v518
    %v597 = vpack.c.b16 %v523, %v521
    %v598 = vpack.c.b16 %v524, %v522
    %v599 = vpack.c.b16 %v527, %v525
    %v600 = vpack.c.b16 %v528, %v526
    %v601 = vpack.c.b16 %v531, %v529
    %v602 = vpack.c.b16 %v532, %v530
    %v603 = vpack.c.b16 %v535, %v533
    %v604 = vpack.c.b16 %v536, %v534
    %v605 = vpack.c.b16 %v539, %v537
    %v606 = vpack.c.b16 %v540, %v538
    %v607 = vpack.c.b16 %v543, %v541
    %v608 = vpack.c.b16 %v544, %v542
    %673 = vmatpush.bf16.msra.mxu0 %v559
    %674 = vmatpush.bf16.msra.mxu0 %v557
    %675 = vmatpush.bf16.msra.mxu0 %v555
    %676 = vmatpush.bf16.msra.mxu0 %v553
    %677 = vmatpush.bf16.msra.mxu0 %v551
    %678 = vmatpush.bf16.msra.mxu0 %v549
    %679 = vmatpush.bf16.msra.mxu0 %v547
    %680 = vmatpush.bf16.msra.mxu0 %v545
    %681 = vmatmul.bf16.gmra.mxu0 %v219
    %v682 = vpop.f32.mrf.mxu0
    %v683 = vadd.f32 %v349, %v682
    %v684 = vpop.f32.mrf.mxu0
    %v685 = vadd.f32 %v349, %v684
    %686 = vmatmul.bf16.gmra.mxu0 %v223
    %v687 = vpop.f32.mrf.mxu0
    %v688 = vadd.f32 %v349, %v687
    %v689 = vpop.f32.mrf.mxu0
    %v690 = vadd.f32 %v349, %v689
    %691 = vmatmul.bf16.gmra.mxu0 %v227
    %v692 = vpop.f32.mrf.mxu0
    %v693 = vadd.f32 %v349, %v692
    %v694 = vpop.f32.mrf.mxu0
    %v695 = vadd.f32 %v349, %v694
    %696 = vmatmul.bf16.gmra.mxu0 %v231
    %v697 = vpop.f32.mrf.mxu0
    %v698 = vadd.f32 %v349, %v697
    %v699 = vpop.f32.mrf.mxu0
    %v700 = vadd.f32 %v349, %v699
    %701 = vmatmul.bf16.gmra.mxu0 %v235
    %v702 = vpop.f32.mrf.mxu0
    %v703 = vadd.f32 %v349, %v702
    %v704 = vpop.f32.mrf.mxu0
    %v705 = vadd.f32 %v349, %v704
    %706 = vmatmul.bf16.gmra.mxu0 %v239
    %v707 = vpop.f32.mrf.mxu0
    %v708 = vadd.f32 %v349, %v707
    %v709 = vpop.f32.mrf.mxu0
    %v710 = vadd.f32 %v349, %v709
    %711 = vmatmul.bf16.gmra.mxu0 %v243
    %v712 = vpop.f32.mrf.mxu0
    %v713 = vadd.f32 %v349, %v712
    %v714 = vpop.f32.mrf.mxu0
    %v715 = vadd.f32 %v349, %v714
    %716 = vmatmul.bf16.gmra.mxu0 %v247
    %v717 = vpop.f32.mrf.mxu0
    %v718 = vadd.f32 %v349, %v717
    %v719 = vpop.f32.mrf.mxu0
    %v720 = vadd.f32 %v349, %v719
    %721 = vmatmul.bf16.gmra.mxu0 %v251
    %v722 = vpop.f32.mrf.mxu0
    %v723 = vadd.f32 %v349, %v722
    %v724 = vpop.f32.mrf.mxu0
    %v725 = vadd.f32 %v349, %v724
    %726 = vmatmul.bf16.gmra.mxu0 %v255
    %v727 = vpop.f32.mrf.mxu0
    %v728 = vadd.f32 %v349, %v727
    %v729 = vpop.f32.mrf.mxu0
    %v730 = vadd.f32 %v349, %v729
    %731 = vmatmul.bf16.gmra.mxu0 %v259
    %v732 = vpop.f32.mrf.mxu0
    %v733 = vadd.f32 %v349, %v732
    %v734 = vpop.f32.mrf.mxu0
    %v735 = vadd.f32 %v349, %v734
    %736 = vmatmul.bf16.gmra.mxu0 %v263
    %v737 = vpop.f32.mrf.mxu0
    %v738 = vadd.f32 %v349, %v737
    %v739 = vpop.f32.mrf.mxu0
    %v740 = vadd.f32 %v349, %v739
    %741 = vmatmul.bf16.gmra.mxu0 %v267
    %v742 = vpop.f32.mrf.mxu0
    %v743 = vadd.f32 %v349, %v742
    %v744 = vpop.f32.mrf.mxu0
    %v745 = vadd.f32 %v349, %v744
    %746 = vmatmul.bf16.gmra.mxu0 %v271
    %v747 = vpop.f32.mrf.mxu0
    %v748 = vadd.f32 %v349, %v747
    %v749 = vpop.f32.mrf.mxu0
    %v750 = vadd.f32 %v349, %v749
    %751 = vmatmul.bf16.gmra.mxu0 %v275
    %v752 = vpop.f32.mrf.mxu0
    %v753 = vadd.f32 %v349, %v752
    %v754 = vpop.f32.mrf.mxu0
    %v755 = vadd.f32 %v349, %v754
    %756 = vmatmul.bf16.gmra.mxu0 %v279
    %v757 = vpop.f32.mrf.mxu0
    %v758 = vadd.f32 %v349, %v757
    %v759 = vpop.f32.mrf.mxu0
    %v760 = vadd.f32 %v349, %v759
    %761 = vdwg.mxu0
    %762 = vmatpush.bf16.msra.mxu0 %v575
    %763 = vmatpush.bf16.msra.mxu0 %v573
    %764 = vmatpush.bf16.msra.mxu0 %v571
    %765 = vmatpush.bf16.msra.mxu0 %v569
    %766 = vmatpush.bf16.msra.mxu0 %v567
    %767 = vmatpush.bf16.msra.mxu0 %v565
    %768 = vmatpush.bf16.msra.mxu0 %v563
    %769 = vmatpush.bf16.msra.mxu0 %v561
    %770 = vmatmul.bf16.gmra.mxu0 %v220
    %v771 = vpop.f32.mrf.mxu0
    %v772 = vadd.f32 %v683, %v771
    %v773 = vpop.f32.mrf.mxu0
    %v774 = vadd.f32 %v685, %v773
    %775 = vmatmul.bf16.gmra.mxu0 %v224
    %v776 = vpop.f32.mrf.mxu0
    %v777 = vadd.f32 %v688, %v776
    %v778 = vpop.f32.mrf.mxu0
    %v779 = vadd.f32 %v690, %v778
    %780 = vmatmul.bf16.gmra.mxu0 %v228
    %v781 = vpop.f32.mrf.mxu0
    %v782 = vadd.f32 %v693, %v781
    %v783 = vpop.f32.mrf.mxu0
    %v784 = vadd.f32 %v695, %v783
    %785 = vmatmul.bf16.gmra.mxu0 %v232
    %v786 = vpop.f32.mrf.mxu0
    %v787 = vadd.f32 %v698, %v786
    %v788 = vpop.f32.mrf.mxu0
    %v789 = vadd.f32 %v700, %v788
    %790 = vmatmul.bf16.gmra.mxu0 %v236
    %v791 = vpop.f32.mrf.mxu0
    %v792 = vadd.f32 %v703, %v791
    %v793 = vpop.f32.mrf.mxu0
    %v794 = vadd.f32 %v705, %v793
    %795 = vmatmul.bf16.gmra.mxu0 %v240
    %v796 = vpop.f32.mrf.mxu0
    %v797 = vadd.f32 %v708, %v796
    %v798 = vpop.f32.mrf.mxu0
    %v799 = vadd.f32 %v710, %v798
    %800 = vmatmul.bf16.gmra.mxu0 %v244
    %v801 = vpop.f32.mrf.mxu0
    %v802 = vadd.f32 %v713, %v801
    %v803 = vpop.f32.mrf.mxu0
    %v804 = vadd.f32 %v715, %v803
    %805 = vmatmul.bf16.gmra.mxu0 %v248
    %v806 = vpop.f32.mrf.mxu0
    %v807 = vadd.f32 %v718, %v806
    %v808 = vpop.f32.mrf.mxu0
    %v809 = vadd.f32 %v720, %v808
    %810 = vmatmul.bf16.gmra.mxu0 %v252
    %v811 = vpop.f32.mrf.mxu0
    %v812 = vadd.f32 %v723, %v811
    %v813 = vpop.f32.mrf.mxu0
    %v814 = vadd.f32 %v725, %v813
    %815 = vmatmul.bf16.gmra.mxu0 %v256
    %v816 = vpop.f32.mrf.mxu0
    %v817 = vadd.f32 %v728, %v816
    %v818 = vpop.f32.mrf.mxu0
    %v819 = vadd.f32 %v730, %v818
    %820 = vmatmul.bf16.gmra.mxu0 %v260
    %v821 = vpop.f32.mrf.mxu0
    %v822 = vadd.f32 %v733, %v821
    %v823 = vpop.f32.mrf.mxu0
    %v824 = vadd.f32 %v735, %v823
    %825 = vmatmul.bf16.gmra.mxu0 %v264
    %v826 = vpop.f32.mrf.mxu0
    %v827 = vadd.f32 %v738, %v826
    %v828 = vpop.f32.mrf.mxu0
    %v829 = vadd.f32 %v740, %v828
    %830 = vmatmul.bf16.gmra.mxu0 %v268
    %v831 = vpop.f32.mrf.mxu0
    %v832 = vadd.f32 %v743, %v831
    %v833 = vpop.f32.mrf.mxu0
    %v834 = vadd.f32 %v745, %v833
    %835 = vmatmul.bf16.gmra.mxu0 %v272
    %v836 = vpop.f32.mrf.mxu0
    %v837 = vadd.f32 %v748, %v836
    %v838 = vpop.f32.mrf.mxu0
    %v839 = vadd.f32 %v750, %v838
    %840 = vmatmul.bf16.gmra.mxu0 %v276
    %v841 = vpop.f32.mrf.mxu0
    %v842 = vadd.f32 %v753, %v841
    %v843 = vpop.f32.mrf.mxu0
    %v844 = vadd.f32 %v755, %v843
    %845 = vmatmul.bf16.gmra.mxu0 %v280
    %v846 = vpop.f32.mrf.mxu0
    %v847 = vadd.f32 %v758, %v846
    %v848 = vpop.f32.mrf.mxu0
    %v849 = vadd.f32 %v760, %v848
    %850 = vdwg.mxu0
    %851 = vmatpush.bf16.msra.mxu0 %v591
    %852 = vmatpush.bf16.msra.mxu0 %v589
    %853 = vmatpush.bf16.msra.mxu0 %v587
    %854 = vmatpush.bf16.msra.mxu0 %v585
    %855 = vmatpush.bf16.msra.mxu0 %v583
    %856 = vmatpush.bf16.msra.mxu0 %v581
    %857 = vmatpush.bf16.msra.mxu0 %v579
    %858 = vmatpush.bf16.msra.mxu0 %v577
    %859 = vmatmul.bf16.gmra.mxu0 %v221
    %v860 = vpop.f32.mrf.mxu0
    %v861 = vadd.f32 %v772, %v860
    %v862 = vpop.f32.mrf.mxu0
    %v863 = vadd.f32 %v774, %v862
    %864 = vmatmul.bf16.gmra.mxu0 %v225
    %v865 = vpop.f32.mrf.mxu0
    %v866 = vadd.f32 %v777, %v865
    %v867 = vpop.f32.mrf.mxu0
    %v868 = vadd.f32 %v779, %v867
    %869 = vmatmul.bf16.gmra.mxu0 %v229
    %v870 = vpop.f32.mrf.mxu0
    %v871 = vadd.f32 %v782, %v870
    %v872 = vpop.f32.mrf.mxu0
    %v873 = vadd.f32 %v784, %v872
    %874 = vmatmul.bf16.gmra.mxu0 %v233
    %v875 = vpop.f32.mrf.mxu0
    %v876 = vadd.f32 %v787, %v875
    %v877 = vpop.f32.mrf.mxu0
    %v878 = vadd.f32 %v789, %v877
    %879 = vmatmul.bf16.gmra.mxu0 %v237
    %v880 = vpop.f32.mrf.mxu0
    %v881 = vadd.f32 %v792, %v880
    %v882 = vpop.f32.mrf.mxu0
    %v883 = vadd.f32 %v794, %v882
    %884 = vmatmul.bf16.gmra.mxu0 %v241
    %v885 = vpop.f32.mrf.mxu0
    %v886 = vadd.f32 %v797, %v885
    %v887 = vpop.f32.mrf.mxu0
    %v888 = vadd.f32 %v799, %v887
    %889 = vmatmul.bf16.gmra.mxu0 %v245
    %v890 = vpop.f32.mrf.mxu0
    %v891 = vadd.f32 %v802, %v890
    %v892 = vpop.f32.mrf.mxu0
    %v893 = vadd.f32 %v804, %v892
    %894 = vmatmul.bf16.gmra.mxu0 %v249
    %v895 = vpop.f32.mrf.mxu0
    %v896 = vadd.f32 %v807, %v895
    %v897 = vpop.f32.mrf.mxu0
    %v898 = vadd.f32 %v809, %v897
    %899 = vmatmul.bf16.gmra.mxu0 %v253
    %v900 = vpop.f32.mrf.mxu0
    %v901 = vadd.f32 %v812, %v900
    %v902 = vpop.f32.mrf.mxu0
    %v903 = vadd.f32 %v814, %v902
    %904 = vmatmul.bf16.gmra.mxu0 %v257
    %v905 = vpop.f32.mrf.mxu0
    %v906 = vadd.f32 %v817, %v905
    %v907 = vpop.f32.mrf.mxu0
    %v908 = vadd.f32 %v819, %v907
    %909 = vmatmul.bf16.gmra.mxu0 %v261
    %v910 = vpop.f32.mrf.mxu0
    %v911 = vadd.f32 %v822, %v910
    %v912 = vpop.f32.mrf.mxu0
    %v913 = vadd.f32 %v824, %v912
    %914 = vmatmul.bf16.gmra.mxu0 %v265
    %v915 = vpop.f32.mrf.mxu0
    %v916 = vadd.f32 %v827, %v915
    %v917 = vpop.f32.mrf.mxu0
    %v918 = vadd.f32 %v829, %v917
    %919 = vmatmul.bf16.gmra.mxu0 %v269
    %v920 = vpop.f32.mrf.mxu0
    %v921 = vadd.f32 %v832, %v920
    %v922 = vpop.f32.mrf.mxu0
    %v923 = vadd.f32 %v834, %v922
    %924 = vmatmul.bf16.gmra.mxu0 %v273
    %v925 = vpop.f32.mrf.mxu0
    %v926 = vadd.f32 %v837, %v925
    %v927 = vpop.f32.mrf.mxu0
    %v928 = vadd.f32 %v839, %v927
    %929 = vmatmul.bf16.gmra.mxu0 %v277
    %v930 = vpop.f32.mrf.mxu0
    %v931 = vadd.f32 %v842, %v930
    %v932 = vpop.f32.mrf.mxu0
    %v933 = vadd.f32 %v844, %v932
    %934 = vmatmul.bf16.gmra.mxu0 %v281
    %v935 = vpop.f32.mrf.mxu0
    %v936 = vadd.f32 %v847, %v935
    %v937 = vpop.f32.mrf.mxu0
    %v938 = vadd.f32 %v849, %v937
    %939 = vdwg.mxu0
    %940 = vmatpush.bf16.msra.mxu0 %v607
    %941 = vmatpush.bf16.msra.mxu0 %v605
    %942 = vmatpush.bf16.msra.mxu0 %v603
    %943 = vmatpush.bf16.msra.mxu0 %v601
    %944 = vmatpush.bf16.msra.mxu0 %v599
    %945 = vmatpush.bf16.msra.mxu0 %v597
    %946 = vmatpush.bf16.msra.mxu0 %v595
    %947 = vmatpush.bf16.msra.mxu0 %v593
    %948 = vmatmul.bf16.gmra.mxu0 %v222
    %v949 = vpop.f32.mrf.mxu0
    %v950 = vadd.f32 %v861, %v949
    %v951 = vpop.f32.mrf.mxu0
    %v952 = vadd.f32 %v863, %v951
    %953 = vmatmul.bf16.gmra.mxu0 %v226
    %v954 = vpop.f32.mrf.mxu0
    %v955 = vadd.f32 %v866, %v954
    %v956 = vpop.f32.mrf.mxu0
    %v957 = vadd.f32 %v868, %v956
    %958 = vmatmul.bf16.gmra.mxu0 %v230
    %v959 = vpop.f32.mrf.mxu0
    %v960 = vadd.f32 %v871, %v959
    %v961 = vpop.f32.mrf.mxu0
    %v962 = vadd.f32 %v873, %v961
    %963 = vmatmul.bf16.gmra.mxu0 %v234
    %v964 = vpop.f32.mrf.mxu0
    %v965 = vadd.f32 %v876, %v964
    %v966 = vpop.f32.mrf.mxu0
    %v967 = vadd.f32 %v878, %v966
    %968 = vmatmul.bf16.gmra.mxu0 %v238
    %v969 = vpop.f32.mrf.mxu0
    %v970 = vadd.f32 %v881, %v969
    %v971 = vpop.f32.mrf.mxu0
    %v972 = vadd.f32 %v883, %v971
    %973 = vmatmul.bf16.gmra.mxu0 %v242
    %v974 = vpop.f32.mrf.mxu0
    %v975 = vadd.f32 %v886, %v974
    %v976 = vpop.f32.mrf.mxu0
    %v977 = vadd.f32 %v888, %v976
    %978 = vmatmul.bf16.gmra.mxu0 %v246
    %v979 = vpop.f32.mrf.mxu0
    %v980 = vadd.f32 %v891, %v979
    %v981 = vpop.f32.mrf.mxu0
    %v982 = vadd.f32 %v893, %v981
    %983 = vmatmul.bf16.gmra.mxu0 %v250
    %v984 = vpop.f32.mrf.mxu0
    %v985 = vadd.f32 %v896, %v984
    %v986 = vpop.f32.mrf.mxu0
    %v987 = vadd.f32 %v898, %v986
    %988 = vmatmul.bf16.gmra.mxu0 %v254
    %v989 = vpop.f32.mrf.mxu0
    %v990 = vadd.f32 %v901, %v989
    %v991 = vpop.f32.mrf.mxu0
    %v992 = vadd.f32 %v903, %v991
    %993 = vmatmul.bf16.gmra.mxu0 %v258
    %v994 = vpop.f32.mrf.mxu0
    %v995 = vadd.f32 %v906, %v994
    %v996 = vpop.f32.mrf.mxu0
    %v997 = vadd.f32 %v908, %v996
    %998 = vmatmul.bf16.gmra.mxu0 %v262
    %v999 = vpop.f32.mrf.mxu0
    %v1000 = vadd.f32 %v911, %v999
    %v1001 = vpop.f32.mrf.mxu0
    %v1002 = vadd.f32 %v913, %v1001
    %1003 = vmatmul.bf16.gmra.mxu0 %v266
    %v1004 = vpop.f32.mrf.mxu0
    %v1005 = vadd.f32 %v916, %v1004
    %v1006 = vpop.f32.mrf.mxu0
    %v1007 = vadd.f32 %v918, %v1006
    %1008 = vmatmul.bf16.gmra.mxu0 %v270
    %v1009 = vpop.f32.mrf.mxu0
    %v1010 = vadd.f32 %v921, %v1009
    %v1011 = vpop.f32.mrf.mxu0
    %v1012 = vadd.f32 %v923, %v1011
    %1013 = vmatmul.bf16.gmra.mxu0 %v274
    %v1014 = vpop.f32.mrf.mxu0
    %v1015 = vadd.f32 %v926, %v1014
    %v1016 = vpop.f32.mrf.mxu0
    %v1017 = vadd.f32 %v928, %v1016
    %1018 = vmatmul.bf16.gmra.mxu0 %v278
    %v1019 = vpop.f32.mrf.mxu0
    %v1020 = vadd.f32 %v931, %v1019
    %v1021 = vpop.f32.mrf.mxu0
    %v1022 = vadd.f32 %v933, %v1021
    %1023 = vmatmul.bf16.gmra.mxu0 %v282
    %v1024 = vpop.f32.mrf.mxu0
    %v1025 = vadd.f32 %v936, %v1024
    %v1026 = vpop.f32.mrf.mxu0
    %v1027 = vadd.f32 %v938, %v1026
    %1028 = vdwg.mxu0
    %1029 = vmatpush.bf16.msra.mxu0 %v560
    %1030 = vmatpush.bf16.msra.mxu0 %v558
    %1031 = vmatpush.bf16.msra.mxu0 %v556
    %1032 = vmatpush.bf16.msra.mxu0 %v554
    %1033 = vmatpush.bf16.msra.mxu0 %v552
    %1034 = vmatpush.bf16.msra.mxu0 %v550
    %1035 = vmatpush.bf16.msra.mxu0 %v548
    %1036 = vmatpush.bf16.msra.mxu0 %v546
    %1037 = vmatmul.bf16.gmra.mxu0 %v219
    %v1038 = vpop.f32.mrf.mxu0
    %v1039 = vadd.f32 %v350, %v1038
    %v1040 = vpop.f32.mrf.mxu0
    %v1041 = vadd.f32 %v350, %v1040
    %1042 = vmatmul.bf16.gmra.mxu0 %v223
    %v1043 = vpop.f32.mrf.mxu0
    %v1044 = vadd.f32 %v350, %v1043
    %v1045 = vpop.f32.mrf.mxu0
    %v1046 = vadd.f32 %v350, %v1045
    %1047 = vmatmul.bf16.gmra.mxu0 %v227
    %v1048 = vpop.f32.mrf.mxu0
    %v1049 = vadd.f32 %v350, %v1048
    %v1050 = vpop.f32.mrf.mxu0
    %v1051 = vadd.f32 %v350, %v1050
    %1052 = vmatmul.bf16.gmra.mxu0 %v231
    %v1053 = vpop.f32.mrf.mxu0
    %v1054 = vadd.f32 %v350, %v1053
    %v1055 = vpop.f32.mrf.mxu0
    %v1056 = vadd.f32 %v350, %v1055
    %1057 = vmatmul.bf16.gmra.mxu0 %v235
    %v1058 = vpop.f32.mrf.mxu0
    %v1059 = vadd.f32 %v350, %v1058
    %v1060 = vpop.f32.mrf.mxu0
    %v1061 = vadd.f32 %v350, %v1060
    %1062 = vmatmul.bf16.gmra.mxu0 %v239
    %v1063 = vpop.f32.mrf.mxu0
    %v1064 = vadd.f32 %v350, %v1063
    %v1065 = vpop.f32.mrf.mxu0
    %v1066 = vadd.f32 %v350, %v1065
    %1067 = vmatmul.bf16.gmra.mxu0 %v243
    %v1068 = vpop.f32.mrf.mxu0
    %v1069 = vadd.f32 %v350, %v1068
    %v1070 = vpop.f32.mrf.mxu0
    %v1071 = vadd.f32 %v350, %v1070
    %1072 = vmatmul.bf16.gmra.mxu0 %v247
    %v1073 = vpop.f32.mrf.mxu0
    %v1074 = vadd.f32 %v350, %v1073
    %v1075 = vpop.f32.mrf.mxu0
    %v1076 = vadd.f32 %v350, %v1075
    %1077 = vmatmul.bf16.gmra.mxu0 %v251
    %v1078 = vpop.f32.mrf.mxu0
    %v1079 = vadd.f32 %v350, %v1078
    %v1080 = vpop.f32.mrf.mxu0
    %v1081 = vadd.f32 %v350, %v1080
    %1082 = vmatmul.bf16.gmra.mxu0 %v255
    %v1083 = vpop.f32.mrf.mxu0
    %v1084 = vadd.f32 %v350, %v1083
    %v1085 = vpop.f32.mrf.mxu0
    %v1086 = vadd.f32 %v350, %v1085
    %1087 = vmatmul.bf16.gmra.mxu0 %v259
    %v1088 = vpop.f32.mrf.mxu0
    %v1089 = vadd.f32 %v350, %v1088
    %v1090 = vpop.f32.mrf.mxu0
    %v1091 = vadd.f32 %v350, %v1090
    %1092 = vmatmul.bf16.gmra.mxu0 %v263
    %v1093 = vpop.f32.mrf.mxu0
    %v1094 = vadd.f32 %v350, %v1093
    %v1095 = vpop.f32.mrf.mxu0
    %v1096 = vadd.f32 %v350, %v1095
    %1097 = vmatmul.bf16.gmra.mxu0 %v267
    %v1098 = vpop.f32.mrf.mxu0
    %v1099 = vadd.f32 %v350, %v1098
    %v1100 = vpop.f32.mrf.mxu0
    %v1101 = vadd.f32 %v350, %v1100
    %1102 = vmatmul.bf16.gmra.mxu0 %v271
    %v1103 = vpop.f32.mrf.mxu0
    %v1104 = vadd.f32 %v350, %v1103
    %v1105 = vpop.f32.mrf.mxu0
    %v1106 = vadd.f32 %v350, %v1105
    %1107 = vmatmul.bf16.gmra.mxu0 %v275
    %v1108 = vpop.f32.mrf.mxu0
    %v1109 = vadd.f32 %v350, %v1108
    %v1110 = vpop.f32.mrf.mxu0
    %v1111 = vadd.f32 %v350, %v1110
    %1112 = vmatmul.bf16.gmra.mxu0 %v279
    %v1113 = vpop.f32.mrf.mxu0
    %v1114 = vadd.f32 %v350, %v1113
    %v1115 = vpop.f32.mrf.mxu0
    %v1116 = vadd.f32 %v350, %v1115
    %1117 = vdwg.mxu0
    %1118 = vmatpush.bf16.msra.mxu0 %v576
    %1119 = vmatpush.bf16.msra.mxu0 %v574
    %1120 = vmatpush.bf16.msra.mxu0 %v572
    %1121 = vmatpush.bf16.msra.mxu0 %v570
    %1122 = vmatpush.bf16.msra.mxu0 %v568
    %1123 = vmatpush.bf16.msra.mxu0 %v566
    %1124 = vmatpush.bf16.msra.mxu0 %v564
    %1125 = vmatpush.bf16.msra.mxu0 %v562
    %1126 = vmatmul.bf16.gmra.mxu0 %v220
    %v1127 = vpop.f32.mrf.mxu0
    %v1128 = vadd.f32 %v1039, %v1127
    %v1129 = vpop.f32.mrf.mxu0
    %v1130 = vadd.f32 %v1041, %v1129
    %1131 = vmatmul.bf16.gmra.mxu0 %v224
    %v1132 = vpop.f32.mrf.mxu0
    %v1133 = vadd.f32 %v1044, %v1132
    %v1134 = vpop.f32.mrf.mxu0
    %v1135 = vadd.f32 %v1046, %v1134
    %1136 = vmatmul.bf16.gmra.mxu0 %v228
    %v1137 = vpop.f32.mrf.mxu0
    %v1138 = vadd.f32 %v1049, %v1137
    %v1139 = vpop.f32.mrf.mxu0
    %v1140 = vadd.f32 %v1051, %v1139
    %1141 = vmatmul.bf16.gmra.mxu0 %v232
    %v1142 = vpop.f32.mrf.mxu0
    %v1143 = vadd.f32 %v1054, %v1142
    %v1144 = vpop.f32.mrf.mxu0
    %v1145 = vadd.f32 %v1056, %v1144
    %1146 = vmatmul.bf16.gmra.mxu0 %v236
    %v1147 = vpop.f32.mrf.mxu0
    %v1148 = vadd.f32 %v1059, %v1147
    %v1149 = vpop.f32.mrf.mxu0
    %v1150 = vadd.f32 %v1061, %v1149
    %1151 = vmatmul.bf16.gmra.mxu0 %v240
    %v1152 = vpop.f32.mrf.mxu0
    %v1153 = vadd.f32 %v1064, %v1152
    %v1154 = vpop.f32.mrf.mxu0
    %v1155 = vadd.f32 %v1066, %v1154
    %1156 = vmatmul.bf16.gmra.mxu0 %v244
    %v1157 = vpop.f32.mrf.mxu0
    %v1158 = vadd.f32 %v1069, %v1157
    %v1159 = vpop.f32.mrf.mxu0
    %v1160 = vadd.f32 %v1071, %v1159
    %1161 = vmatmul.bf16.gmra.mxu0 %v248
    %v1162 = vpop.f32.mrf.mxu0
    %v1163 = vadd.f32 %v1074, %v1162
    %v1164 = vpop.f32.mrf.mxu0
    %v1165 = vadd.f32 %v1076, %v1164
    %1166 = vmatmul.bf16.gmra.mxu0 %v252
    %v1167 = vpop.f32.mrf.mxu0
    %v1168 = vadd.f32 %v1079, %v1167
    %v1169 = vpop.f32.mrf.mxu0
    %v1170 = vadd.f32 %v1081, %v1169
    %1171 = vmatmul.bf16.gmra.mxu0 %v256
    %v1172 = vpop.f32.mrf.mxu0
    %v1173 = vadd.f32 %v1084, %v1172
    %v1174 = vpop.f32.mrf.mxu0
    %v1175 = vadd.f32 %v1086, %v1174
    %1176 = vmatmul.bf16.gmra.mxu0 %v260
    %v1177 = vpop.f32.mrf.mxu0
    %v1178 = vadd.f32 %v1089, %v1177
    %v1179 = vpop.f32.mrf.mxu0
    %v1180 = vadd.f32 %v1091, %v1179
    %1181 = vmatmul.bf16.gmra.mxu0 %v264
    %v1182 = vpop.f32.mrf.mxu0
    %v1183 = vadd.f32 %v1094, %v1182
    %v1184 = vpop.f32.mrf.mxu0
    %v1185 = vadd.f32 %v1096, %v1184
    %1186 = vmatmul.bf16.gmra.mxu0 %v268
    %v1187 = vpop.f32.mrf.mxu0
    %v1188 = vadd.f32 %v1099, %v1187
    %v1189 = vpop.f32.mrf.mxu0
    %v1190 = vadd.f32 %v1101, %v1189
    %1191 = vmatmul.bf16.gmra.mxu0 %v272
    %v1192 = vpop.f32.mrf.mxu0
    %v1193 = vadd.f32 %v1104, %v1192
    %v1194 = vpop.f32.mrf.mxu0
    %v1195 = vadd.f32 %v1106, %v1194
    %1196 = vmatmul.bf16.gmra.mxu0 %v276
    %v1197 = vpop.f32.mrf.mxu0
    %v1198 = vadd.f32 %v1109, %v1197
    %v1199 = vpop.f32.mrf.mxu0
    %v1200 = vadd.f32 %v1111, %v1199
    %1201 = vmatmul.bf16.gmra.mxu0 %v280
    %v1202 = vpop.f32.mrf.mxu0
    %v1203 = vadd.f32 %v1114, %v1202
    %v1204 = vpop.f32.mrf.mxu0
    %v1205 = vadd.f32 %v1116, %v1204
    %1206 = vdwg.mxu0
    %1207 = vmatpush.bf16.msra.mxu0 %v592
    %1208 = vmatpush.bf16.msra.mxu0 %v590
    %1209 = vmatpush.bf16.msra.mxu0 %v588
    %1210 = vmatpush.bf16.msra.mxu0 %v586
    %1211 = vmatpush.bf16.msra.mxu0 %v584
    %1212 = vmatpush.bf16.msra.mxu0 %v582
    %1213 = vmatpush.bf16.msra.mxu0 %v580
    %1214 = vmatpush.bf16.msra.mxu0 %v578
    %1215 = vmatmul.bf16.gmra.mxu0 %v221
    %v1216 = vpop.f32.mrf.mxu0
    %v1217 = vadd.f32 %v1128, %v1216
    %v1218 = vpop.f32.mrf.mxu0
    %v1219 = vadd.f32 %v1130, %v1218
    %1220 = vmatmul.bf16.gmra.mxu0 %v225
    %v1221 = vpop.f32.mrf.mxu0
    %v1222 = vadd.f32 %v1133, %v1221
    %v1223 = vpop.f32.mrf.mxu0
    %v1224 = vadd.f32 %v1135, %v1223
    %1225 = vmatmul.bf16.gmra.mxu0 %v229
    %v1226 = vpop.f32.mrf.mxu0
    %v1227 = vadd.f32 %v1138, %v1226
    %v1228 = vpop.f32.mrf.mxu0
    %v1229 = vadd.f32 %v1140, %v1228
    %1230 = vmatmul.bf16.gmra.mxu0 %v233
    %v1231 = vpop.f32.mrf.mxu0
    %v1232 = vadd.f32 %v1143, %v1231
    %v1233 = vpop.f32.mrf.mxu0
    %v1234 = vadd.f32 %v1145, %v1233
    %1235 = vmatmul.bf16.gmra.mxu0 %v237
    %v1236 = vpop.f32.mrf.mxu0
    %v1237 = vadd.f32 %v1148, %v1236
    %v1238 = vpop.f32.mrf.mxu0
    %v1239 = vadd.f32 %v1150, %v1238
    %1240 = vmatmul.bf16.gmra.mxu0 %v241
    %v1241 = vpop.f32.mrf.mxu0
    %v1242 = vadd.f32 %v1153, %v1241
    %v1243 = vpop.f32.mrf.mxu0
    %v1244 = vadd.f32 %v1155, %v1243
    %1245 = vmatmul.bf16.gmra.mxu0 %v245
    %v1246 = vpop.f32.mrf.mxu0
    %v1247 = vadd.f32 %v1158, %v1246
    %v1248 = vpop.f32.mrf.mxu0
    %v1249 = vadd.f32 %v1160, %v1248
    %1250 = vmatmul.bf16.gmra.mxu0 %v249
    %v1251 = vpop.f32.mrf.mxu0
    %v1252 = vadd.f32 %v1163, %v1251
    %v1253 = vpop.f32.mrf.mxu0
    %v1254 = vadd.f32 %v1165, %v1253
    %1255 = vmatmul.bf16.gmra.mxu0 %v253
    %v1256 = vpop.f32.mrf.mxu0
    %v1257 = vadd.f32 %v1168, %v1256
    %v1258 = vpop.f32.mrf.mxu0
    %v1259 = vadd.f32 %v1170, %v1258
    %1260 = vmatmul.bf16.gmra.mxu0 %v257
    %v1261 = vpop.f32.mrf.mxu0
    %v1262 = vadd.f32 %v1173, %v1261
    %v1263 = vpop.f32.mrf.mxu0
    %v1264 = vadd.f32 %v1175, %v1263
    %1265 = vmatmul.bf16.gmra.mxu0 %v261
    %v1266 = vpop.f32.mrf.mxu0
    %v1267 = vadd.f32 %v1178, %v1266
    %v1268 = vpop.f32.mrf.mxu0
    %v1269 = vadd.f32 %v1180, %v1268
    %1270 = vmatmul.bf16.gmra.mxu0 %v265
    %v1271 = vpop.f32.mrf.mxu0
    %v1272 = vadd.f32 %v1183, %v1271
    %v1273 = vpop.f32.mrf.mxu0
    %v1274 = vadd.f32 %v1185, %v1273
    %1275 = vmatmul.bf16.gmra.mxu0 %v269
    %v1276 = vpop.f32.mrf.mxu0
    %v1277 = vadd.f32 %v1188, %v1276
    %v1278 = vpop.f32.mrf.mxu0
    %v1279 = vadd.f32 %v1190, %v1278
    %1280 = vmatmul.bf16.gmra.mxu0 %v273
    %v1281 = vpop.f32.mrf.mxu0
    %v1282 = vadd.f32 %v1193, %v1281
    %v1283 = vpop.f32.mrf.mxu0
    %v1284 = vadd.f32 %v1195, %v1283
    %1285 = vmatmul.bf16.gmra.mxu0 %v277
    %v1286 = vpop.f32.mrf.mxu0
    %v1287 = vadd.f32 %v1198, %v1286
    %v1288 = vpop.f32.mrf.mxu0
    %v1289 = vadd.f32 %v1200, %v1288
    %1290 = vmatmul.bf16.gmra.mxu0 %v281
    %v1291 = vpop.f32.mrf.mxu0
    %v1292 = vadd.f32 %v1203, %v1291
    %v1293 = vpop.f32.mrf.mxu0
    %v1294 = vadd.f32 %v1205, %v1293
    %1295 = vdwg.mxu0
    %1296 = vmatpush.bf16.msra.mxu0 %v608
    %1297 = vmatpush.bf16.msra.mxu0 %v606
    %1298 = vmatpush.bf16.msra.mxu0 %v604
    %1299 = vmatpush.bf16.msra.mxu0 %v602
    %1300 = vmatpush.bf16.msra.mxu0 %v600
    %1301 = vmatpush.bf16.msra.mxu0 %v598
    %1302 = vmatpush.bf16.msra.mxu0 %v596
    %1303 = vmatpush.bf16.msra.mxu0 %v594
    %1304 = vmatmul.bf16.gmra.mxu0 %v222
    %v1305 = vpop.f32.mrf.mxu0
    %v1306 = vadd.f32 %v1217, %v1305
    %v1307 = vpop.f32.mrf.mxu0
    %v1308 = vadd.f32 %v1219, %v1307
    %1309 = vmatmul.bf16.gmra.mxu0 %v226
    %v1310 = vpop.f32.mrf.mxu0
    %v1311 = vadd.f32 %v1222, %v1310
    %v1312 = vpop.f32.mrf.mxu0
    %v1313 = vadd.f32 %v1224, %v1312
    %1314 = vmatmul.bf16.gmra.mxu0 %v230
    %v1315 = vpop.f32.mrf.mxu0
    %v1316 = vadd.f32 %v1227, %v1315
    %v1317 = vpop.f32.mrf.mxu0
    %v1318 = vadd.f32 %v1229, %v1317
    %1319 = vmatmul.bf16.gmra.mxu0 %v234
    %v1320 = vpop.f32.mrf.mxu0
    %v1321 = vadd.f32 %v1232, %v1320
    %v1322 = vpop.f32.mrf.mxu0
    %v1323 = vadd.f32 %v1234, %v1322
    %1324 = vmatmul.bf16.gmra.mxu0 %v238
    %v1325 = vpop.f32.mrf.mxu0
    %v1326 = vadd.f32 %v1237, %v1325
    %v1327 = vpop.f32.mrf.mxu0
    %v1328 = vadd.f32 %v1239, %v1327
    %1329 = vmatmul.bf16.gmra.mxu0 %v242
    %v1330 = vpop.f32.mrf.mxu0
    %v1331 = vadd.f32 %v1242, %v1330
    %v1332 = vpop.f32.mrf.mxu0
    %v1333 = vadd.f32 %v1244, %v1332
    %1334 = vmatmul.bf16.gmra.mxu0 %v246
    %v1335 = vpop.f32.mrf.mxu0
    %v1336 = vadd.f32 %v1247, %v1335
    %v1337 = vpop.f32.mrf.mxu0
    %v1338 = vadd.f32 %v1249, %v1337
    %1339 = vmatmul.bf16.gmra.mxu0 %v250
    %v1340 = vpop.f32.mrf.mxu0
    %v1341 = vadd.f32 %v1252, %v1340
    %v1342 = vpop.f32.mrf.mxu0
    %v1343 = vadd.f32 %v1254, %v1342
    %1344 = vmatmul.bf16.gmra.mxu0 %v254
    %v1345 = vpop.f32.mrf.mxu0
    %v1346 = vadd.f32 %v1257, %v1345
    %v1347 = vpop.f32.mrf.mxu0
    %v1348 = vadd.f32 %v1259, %v1347
    %1349 = vmatmul.bf16.gmra.mxu0 %v258
    %v1350 = vpop.f32.mrf.mxu0
    %v1351 = vadd.f32 %v1262, %v1350
    %v1352 = vpop.f32.mrf.mxu0
    %v1353 = vadd.f32 %v1264, %v1352
    %1354 = vmatmul.bf16.gmra.mxu0 %v262
    %v1355 = vpop.f32.mrf.mxu0
    %v1356 = vadd.f32 %v1267, %v1355
    %v1357 = vpop.f32.mrf.mxu0
    %v1358 = vadd.f32 %v1269, %v1357
    %1359 = vmatmul.bf16.gmra.mxu0 %v266
    %v1360 = vpop.f32.mrf.mxu0
    %v1361 = vadd.f32 %v1272, %v1360
    %v1362 = vpop.f32.mrf.mxu0
    %v1363 = vadd.f32 %v1274, %v1362
    %1364 = vmatmul.bf16.gmra.mxu0 %v270
    %v1365 = vpop.f32.mrf.mxu0
    %v1366 = vadd.f32 %v1277, %v1365
    %v1367 = vpop.f32.mrf.mxu0
    %v1368 = vadd.f32 %v1279, %v1367
    %1369 = vmatmul.bf16.gmra.mxu0 %v274
    %v1370 = vpop.f32.mrf.mxu0
    %v1371 = vadd.f32 %v1282, %v1370
    %v1372 = vpop.f32.mrf.mxu0
    %v1373 = vadd.f32 %v1284, %v1372
    %1374 = vmatmul.bf16.gmra.mxu0 %v278
    %v1375 = vpop.f32.mrf.mxu0
    %v1376 = vadd.f32 %v1287, %v1375
    %v1377 = vpop.f32.mrf.mxu0
    %v1378 = vadd.f32 %v1289, %v1377
    %1379 = vmatmul.bf16.gmra.mxu0 %v282
    %v1380 = vpop.f32.mrf.mxu0
    %v1381 = vadd.f32 %v1292, %v1380
    %v1382 = vpop.f32.mrf.mxu0
    %v1383 = vadd.f32 %v1294, %v1382
    %1384 = vdwg.mxu0
    %v1385 = vmul.f32 %v950, 0.2
    %v1386 = vmul.f32 %v1306, 0.2
    %v1387 = vmul.f32 %v952, 0.2
    %v1388 = vmul.f32 %v1308, 0.2
    %v1389 = vmul.f32 %v955, 0.2
    %v1390 = vmul.f32 %v1311, 0.2
    %v1391 = vmul.f32 %v957, 0.2
    %v1392 = vmul.f32 %v1313, 0.2
    %v1393 = vmul.f32 %v960, 0.2
    %v1394 = vmul.f32 %v1316, 0.2
    %v1395 = vmul.f32 %v962, 0.2
    %v1396 = vmul.f32 %v1318, 0.2
    %v1397 = vmul.f32 %v965, 0.2
    %v1398 = vmul.f32 %v1321, 0.2
    %v1399 = vmul.f32 %v967, 0.2
    %v1400 = vmul.f32 %v1323, 0.2
    %v1401 = vmul.f32 %v970, 0.2
    %v1402 = vmul.f32 %v1326, 0.2
    %v1403 = vmul.f32 %v972, 0.2
    %v1404 = vmul.f32 %v1328, 0.2
    %v1405 = vmul.f32 %v975, 0.2
    %v1406 = vmul.f32 %v1331, 0.2
    %v1407 = vmul.f32 %v977, 0.2
    %v1408 = vmul.f32 %v1333, 0.2
    %v1409 = vmul.f32 %v980, 0.2
    %v1410 = vmul.f32 %v1336, 0.2
    %v1411 = vmul.f32 %v982, 0.2
    %v1412 = vmul.f32 %v1338, 0.2
    %v1413 = vmul.f32 %v985, 0.2
    %v1414 = vmul.f32 %v1341, 0.2
    %v1415 = vmul.f32 %v987, 0.2
    %v1416 = vmul.f32 %v1343, 0.2
    %v1417 = vmul.f32 %v990, 0.2
    %v1418 = vmul.f32 %v1346, 0.2
    %v1419 = vmul.f32 %v992, 0.2
    %v1420 = vmul.f32 %v1348, 0.2
    %v1421 = vmul.f32 %v995, 0.2
    %v1422 = vmul.f32 %v1351, 0.2
    %v1423 = vmul.f32 %v997, 0.2
    %v1424 = vmul.f32 %v1353, 0.2
    %v1425 = vmul.f32 %v1000, 0.2
    %v1426 = vmul.f32 %v1356, 0.2
    %v1427 = vmul.f32 %v1002, 0.2
    %v1428 = vmul.f32 %v1358, 0.2
    %v1429 = vmul.f32 %v1005, 0.2
    %v1430 = vmul.f32 %v1361, 0.2
    %v1431 = vmul.f32 %v1007, 0.2
    %v1432 = vmul.f32 %v1363, 0.2
    %v1433 = vmul.f32 %v1010, 0.2
    %v1434 = vmul.f32 %v1366, 0.2
    %v1435 = vmul.f32 %v1012, 0.2
    %v1436 = vmul.f32 %v1368, 0.2
    %v1437 = vmul.f32 %v1015, 0.2
    %v1438 = vmul.f32 %v1371, 0.2
    %v1439 = vmul.f32 %v1017, 0.2
    %v1440 = vmul.f32 %v1373, 0.2
    %v1441 = vmul.f32 %v1020, 0.2
    %v1442 = vmul.f32 %v1376, 0.2
    %v1443 = vmul.f32 %v1022, 0.2
    %v1444 = vmul.f32 %v1378, 0.2
    %v1445 = vmul.f32 %v1025, 0.2
    %v1446 = vmul.f32 %v1381, 0.2
    %v1447 = vmul.f32 %v1027, 0.2
    %v1448 = vmul.f32 %v1383, 0.2
    %v1449 = vmax.f32 %v950, %v1385
    %v1450 = vmax.f32 %v1306, %v1386
    %v1451 = vmax.f32 %v952, %v1387
    %v1452 = vmax.f32 %v1308, %v1388
    %v1453 = vmax.f32 %v955, %v1389
    %v1454 = vmax.f32 %v1311, %v1390
    %v1455 = vmax.f32 %v957, %v1391
    %v1456 = vmax.f32 %v1313, %v1392
    %v1457 = vmax.f32 %v960, %v1393
    %v1458 = vmax.f32 %v1316, %v1394
    %v1459 = vmax.f32 %v962, %v1395
    %v1460 = vmax.f32 %v1318, %v1396
    %v1461 = vmax.f32 %v965, %v1397
    %v1462 = vmax.f32 %v1321, %v1398
    %v1463 = vmax.f32 %v967, %v1399
    %v1464 = vmax.f32 %v1323, %v1400
    %v1465 = vmax.f32 %v970, %v1401
    %v1466 = vmax.f32 %v1326, %v1402
    %v1467 = vmax.f32 %v972, %v1403
    %v1468 = vmax.f32 %v1328, %v1404
    %v1469 = vmax.f32 %v975, %v1405
    %v1470 = vmax.f32 %v1331, %v1406
    %v1471 = vmax.f32 %v977, %v1407
    %v1472 = vmax.f32 %v1333, %v1408
    %v1473 = vmax.f32 %v980, %v1409
    %v1474 = vmax.f32 %v1336, %v1410
    %v1475 = vmax.f32 %v982, %v1411
    %v1476 = vmax.f32 %v1338, %v1412
    %v1477 = vmax.f32 %v985, %v1413
    %v1478 = vmax.f32 %v1341, %v1414
    %v1479 = vmax.f32 %v987, %v1415
    %v1480 = vmax.f32 %v1343, %v1416
    %v1481 = vmax.f32 %v990, %v1417
    %v1482 = vmax.f32 %v1346, %v1418
    %v1483 = vmax.f32 %v992, %v1419
    %v1484 = vmax.f32 %v1348, %v1420
    %v1485 = vmax.f32 %v995, %v1421
    %v1486 = vmax.f32 %v1351, %v1422
    %v1487 = vmax.f32 %v997, %v1423
    %v1488 = vmax.f32 %v1353, %v1424
    %v1489 = vmax.f32 %v1000, %v1425
    %v1490 = vmax.f32 %v1356, %v1426
    %v1491 = vmax.f32 %v1002, %v1427
    %v1492 = vmax.f32 %v1358, %v1428
    %v1493 = vmax.f32 %v1005, %v1429
    %v1494 = vmax.f32 %v1361, %v1430
    %v1495 = vmax.f32 %v1007, %v1431
    %v1496 = vmax.f32 %v1363, %v1432
    %v1497 = vmax.f32 %v1010, %v1433
    %v1498 = vmax.f32 %v1366, %v1434
    %v1499 = vmax.f32 %v1012, %v1435
    %v1500 = vmax.f32 %v1368, %v1436
    %v1501 = vmax.f32 %v1015, %v1437
    %v1502 = vmax.f32 %v1371, %v1438
    %v1503 = vmax.f32 %v1017, %v1439
    %v1504 = vmax.f32 %v1373, %v1440
    %v1505 = vmax.f32 %v1020, %v1441
    %v1506 = vmax.f32 %v1376, %v1442
    %v1507 = vmax.f32 %v1022, %v1443
    %v1508 = vmax.f32 %v1378, %v1444
    %v1509 = vmax.f32 %v1025, %v1445
    %v1510 = vmax.f32 %v1381, %v1446
    %v1511 = vmax.f32 %v1027, %v1447
    %v1512 = vmax.f32 %v1383, %v1448
    %v1513 = vpack.c.bf16 %v1451, %v1449
    %v1514 = vpack.c.bf16 %v1452, %v1450
    %v1515 = vpack.c.bf16 %v1455, %v1453
    %v1516 = vpack.c.bf16 %v1456, %v1454
    %v1517 = vpack.c.bf16 %v1459, %v1457
    %v1518 = vpack.c.bf16 %v1460, %v1458
    %v1519 = vpack.c.bf16 %v1463, %v1461
    %v1520 = vpack.c.bf16 %v1464, %v1462
    %v1521 = vpack.c.bf16 %v1467, %v1465
    %v1522 = vpack.c.bf16 %v1468, %v1466
    %v1523 = vpack.c.bf16 %v1471, %v1469
    %v1524 = vpack.c.bf16 %v1472, %v1470
    %v1525 = vpack.c.bf16 %v1475, %v1473
    %v1526 = vpack.c.bf16 %v1476, %v1474
    %v1527 = vpack.c.bf16 %v1479, %v1477
    %v1528 = vpack.c.bf16 %v1480, %v1478
    %v1529 = vpack.c.bf16 %v1483, %v1481
    %v1530 = vpack.c.bf16 %v1484, %v1482
    %v1531 = vpack.c.bf16 %v1487, %v1485
    %v1532 = vpack.c.bf16 %v1488, %v1486
    %v1533 = vpack.c.bf16 %v1491, %v1489
    %v1534 = vpack.c.bf16 %v1492, %v1490
    %v1535 = vpack.c.bf16 %v1495, %v1493
    %v1536 = vpack.c.bf16 %v1496, %v1494
    %v1537 = vpack.c.bf16 %v1499, %v1497
    %v1538 = vpack.c.bf16 %v1500, %v1498
    %v1539 = vpack.c.bf16 %v1503, %v1501
    %v1540 = vpack.c.bf16 %v1504, %v1502
    %v1541 = vpack.c.bf16 %v1507, %v1505
    %v1542 = vpack.c.bf16 %v1508, %v1506
    %v1543 = vpack.c.bf16 %v1511, %v1509
    %v1544 = vpack.c.bf16 %v1512, %v1510
    %v1545 = vld [vmem:[#allocation8] sm:$0xf]
    %v1546 = vld [vmem:[#allocation8 + $0x4] sm:$0xf]
    %v1547 = vld [vmem:[#allocation8 + $0x8] sm:$0xf]
    %v1548 = vld [vmem:[#allocation8 + $0xc] sm:$0xf]
    %v1549 = vld [vmem:[#allocation8 + $0x10] sm:$0xf]
    %v1550 = vld [vmem:[#allocation8 + $0x14] sm:$0xf]
    %v1551 = vld [vmem:[#allocation8 + $0x18] sm:$0xf]
    %v1552 = vld [vmem:[#allocation8 + $0x1c] sm:$0xf]
    %v1553 = vld [vmem:[#allocation8 + $0x20] sm:$0xf]
    %v1554 = vld [vmem:[#allocation8 + $0x24] sm:$0xf]
    %v1555 = vld [vmem:[#allocation8 + $0x28] sm:$0xf]
    %v1556 = vld [vmem:[#allocation8 + $0x2c] sm:$0xf]
    %v1557 = vld [vmem:[#allocation8 + $0x30] sm:$0xf]
    %v1558 = vld [vmem:[#allocation8 + $0x34] sm:$0xf]
    %v1559 = vld [vmem:[#allocation8 + $0x38] sm:$0xf]
    %v1560 = vld [vmem:[#allocation8 + $0x3c] sm:$0xf]
    %v1561 = vld [vmem:[#allocation8 + $0x40] sm:$0xf]
    %v1562 = vld [vmem:[#allocation8 + $0x44] sm:$0xf]
    %v1563 = vld [vmem:[#allocation8 + $0x48] sm:$0xf]
    %v1564 = vld [vmem:[#allocation8 + $0x4c] sm:$0xf]
    %v1565 = vld [vmem:[#allocation8 + $0x50] sm:$0xf]
    %v1566 = vld [vmem:[#allocation8 + $0x54] sm:$0xf]
    %v1567 = vld [vmem:[#allocation8 + $0x58] sm:$0xf]
    %v1568 = vld [vmem:[#allocation8 + $0x5c] sm:$0xf]
    %v1569 = vld [vmem:[#allocation8 + $0x60] sm:$0xf]
    %v1570 = vld [vmem:[#allocation8 + $0x64] sm:$0xf]
    %v1571 = vld [vmem:[#allocation8 + $0x68] sm:$0xf]
    %v1572 = vld [vmem:[#allocation8 + $0x6c] sm:$0xf]
    %v1573 = vld [vmem:[#allocation8 + $0x70] sm:$0xf]
    %v1574 = vld [vmem:[#allocation8 + $0x74] sm:$0xf]
    %v1575 = vld [vmem:[#allocation8 + $0x78] sm:$0xf]
    %v1576 = vld [vmem:[#allocation8 + $0x7c] sm:$0xf]
    %v1577 = vld [vmem:[%s4] sm:$0x1]
    %v1579 = vperm.slane %v1577, 0
    %v1613 = vunpack.c.l.b16 %v1545
    %v1614 = vunpack.c.l.b16 %v1546
    %v1615 = vunpack.c.l.b16 %v1547
    %v1616 = vunpack.c.l.b16 %v1548
    %v1617 = vunpack.c.l.b16 %v1549
    %v1618 = vunpack.c.l.b16 %v1550
    %v1619 = vunpack.c.l.b16 %v1551
    %v1620 = vunpack.c.l.b16 %v1552
    %v1621 = vunpack.c.l.b16 %v1553
    %v1622 = vunpack.c.l.b16 %v1554
    %v1623 = vunpack.c.l.b16 %v1555
    %v1624 = vunpack.c.l.b16 %v1556
    %v1625 = vunpack.c.l.b16 %v1557
    %v1626 = vunpack.c.l.b16 %v1558
    %v1627 = vunpack.c.l.b16 %v1559
    %v1628 = vunpack.c.l.b16 %v1560
    %v1629 = vunpack.c.l.b16 %v1561
    %v1630 = vunpack.c.l.b16 %v1562
    %v1631 = vunpack.c.l.b16 %v1563
    %v1632 = vunpack.c.l.b16 %v1564
    %v1633 = vunpack.c.l.b16 %v1565
    %v1634 = vunpack.c.l.b16 %v1566
    %v1635 = vunpack.c.l.b16 %v1567
    %v1636 = vunpack.c.l.b16 %v1568
    %v1637 = vunpack.c.l.b16 %v1569
    %v1638 = vunpack.c.l.b16 %v1570
    %v1639 = vunpack.c.l.b16 %v1571
    %v1640 = vunpack.c.l.b16 %v1572
    %v1641 = vunpack.c.l.b16 %v1573
    %v1642 = vunpack.c.l.b16 %v1574
    %v1643 = vunpack.c.l.b16 %v1575
    %v1644 = vunpack.c.l.b16 %v1576
    %v1645 = vpack.c.b16 %v1614, %v1613
    %v1646 = vpack.c.b16 %v1616, %v1615
    %v1647 = vpack.c.b16 %v1618, %v1617
    %v1648 = vpack.c.b16 %v1620, %v1619
    %v1649 = vpack.c.b16 %v1622, %v1621
    %v1650 = vpack.c.b16 %v1624, %v1623
    %v1651 = vpack.c.b16 %v1626, %v1625
    %v1652 = vpack.c.b16 %v1628, %v1627
    %v1653 = vpack.c.b16 %v1630, %v1629
    %v1654 = vpack.c.b16 %v1632, %v1631
    %v1655 = vpack.c.b16 %v1634, %v1633
    %v1656 = vpack.c.b16 %v1636, %v1635
    %v1657 = vpack.c.b16 %v1638, %v1637
    %v1658 = vpack.c.b16 %v1640, %v1639
    %v1659 = vpack.c.b16 %v1642, %v1641
    %v1660 = vpack.c.b16 %v1644, %v1643
    %1677 = vmatpush.bf16.msra.mxu0 %v1652
    %1678 = vmatpush.bf16.msra.mxu0 %v1651
    %1679 = vmatpush.bf16.msra.mxu0 %v1650
    %1680 = vmatpush.bf16.msra.mxu0 %v1649
    %1681 = vmatpush.bf16.msra.mxu0 %v1648
    %1682 = vmatpush.bf16.msra.mxu0 %v1647
    %1683 = vmatpush.bf16.msra.mxu0 %v1646
    %1684 = vmatpush.bf16.msra.mxu0 %v1645
    %1685 = vmatmul.bf16.gmra.mxu0 %v1513
    %v1686 = vpop.f32.mrf.mxu0
    %v1687 = vadd.f32 %v1579, %v1686
    %v1688 = vpop.f32.mrf.mxu0
    %v1689 = vadd.f32 %v1579, %v1688
    %1690 = vmatmul.bf16.gmra.mxu0 %v1515
    %v1691 = vpop.f32.mrf.mxu0
    %v1692 = vadd.f32 %v1579, %v1691
    %v1693 = vpop.f32.mrf.mxu0
    %v1694 = vadd.f32 %v1579, %v1693
    %1695 = vmatmul.bf16.gmra.mxu0 %v1517
    %v1696 = vpop.f32.mrf.mxu0
    %v1697 = vadd.f32 %v1579, %v1696
    %v1698 = vpop.f32.mrf.mxu0
    %v1699 = vadd.f32 %v1579, %v1698
    %1700 = vmatmul.bf16.gmra.mxu0 %v1519
    %v1701 = vpop.f32.mrf.mxu0
    %v1702 = vadd.f32 %v1579, %v1701
    %v1703 = vpop.f32.mrf.mxu0
    %v1704 = vadd.f32 %v1579, %v1703
    %1705 = vmatmul.bf16.gmra.mxu0 %v1521
    %v1706 = vpop.f32.mrf.mxu0
    %v1707 = vadd.f32 %v1579, %v1706
    %v1708 = vpop.f32.mrf.mxu0
    %v1709 = vadd.f32 %v1579, %v1708
    %1710 = vmatmul.bf16.gmra.mxu0 %v1523
    %v1711 = vpop.f32.mrf.mxu0
    %v1712 = vadd.f32 %v1579, %v1711
    %v1713 = vpop.f32.mrf.mxu0
    %v1714 = vadd.f32 %v1579, %v1713
    %1715 = vmatmul.bf16.gmra.mxu0 %v1525
    %v1716 = vpop.f32.mrf.mxu0
    %v1717 = vadd.f32 %v1579, %v1716
    %v1718 = vpop.f32.mrf.mxu0
    %v1719 = vadd.f32 %v1579, %v1718
    %1720 = vmatmul.bf16.gmra.mxu0 %v1527
    %v1721 = vpop.f32.mrf.mxu0
    %v1722 = vadd.f32 %v1579, %v1721
    %v1723 = vpop.f32.mrf.mxu0
    %v1724 = vadd.f32 %v1579, %v1723
    %1725 = vmatmul.bf16.gmra.mxu0 %v1529
    %v1726 = vpop.f32.mrf.mxu0
    %v1727 = vadd.f32 %v1579, %v1726
    %v1728 = vpop.f32.mrf.mxu0
    %v1729 = vadd.f32 %v1579, %v1728
    %1730 = vmatmul.bf16.gmra.mxu0 %v1531
    %v1731 = vpop.f32.mrf.mxu0
    %v1732 = vadd.f32 %v1579, %v1731
    %v1733 = vpop.f32.mrf.mxu0
    %v1734 = vadd.f32 %v1579, %v1733
    %1735 = vmatmul.bf16.gmra.mxu0 %v1533
    %v1736 = vpop.f32.mrf.mxu0
    %v1737 = vadd.f32 %v1579, %v1736
    %v1738 = vpop.f32.mrf.mxu0
    %v1739 = vadd.f32 %v1579, %v1738
    %1740 = vmatmul.bf16.gmra.mxu0 %v1535
    %v1741 = vpop.f32.mrf.mxu0
    %v1742 = vadd.f32 %v1579, %v1741
    %v1743 = vpop.f32.mrf.mxu0
    %v1744 = vadd.f32 %v1579, %v1743
    %1745 = vmatmul.bf16.gmra.mxu0 %v1537
    %v1746 = vpop.f32.mrf.mxu0
    %v1747 = vadd.f32 %v1579, %v1746
    %v1748 = vpop.f32.mrf.mxu0
    %v1749 = vadd.f32 %v1579, %v1748
    %1750 = vmatmul.bf16.gmra.mxu0 %v1539
    %v1751 = vpop.f32.mrf.mxu0
    %v1752 = vadd.f32 %v1579, %v1751
    %v1753 = vpop.f32.mrf.mxu0
    %v1754 = vadd.f32 %v1579, %v1753
    %1755 = vmatmul.bf16.gmra.mxu0 %v1541
    %v1756 = vpop.f32.mrf.mxu0
    %v1757 = vadd.f32 %v1579, %v1756
    %v1758 = vpop.f32.mrf.mxu0
    %v1759 = vadd.f32 %v1579, %v1758
    %1760 = vmatmul.bf16.gmra.mxu0 %v1543
    %v1761 = vpop.f32.mrf.mxu0
    %v1762 = vadd.f32 %v1579, %v1761
    %v1763 = vpop.f32.mrf.mxu0
    %v1764 = vadd.f32 %v1579, %v1763
    %1765 = vdwg.mxu0
    %1766 = vmatpush.bf16.msra.mxu0 %v1660
    %1767 = vmatpush.bf16.msra.mxu0 %v1659
    %1768 = vmatpush.bf16.msra.mxu0 %v1658
    %1769 = vmatpush.bf16.msra.mxu0 %v1657
    %1770 = vmatpush.bf16.msra.mxu0 %v1656
    %1771 = vmatpush.bf16.msra.mxu0 %v1655
    %1772 = vmatpush.bf16.msra.mxu0 %v1654
    %1773 = vmatpush.bf16.msra.mxu0 %v1653
    %1774 = vmatmul.bf16.gmra.mxu0 %v1514
    %v1775 = vpop.f32.mrf.mxu0
    %v1776 = vadd.f32 %v1687, %v1775
    %v1777 = vpop.f32.mrf.mxu0
    %v1778 = vadd.f32 %v1689, %v1777
    %1779 = vmatmul.bf16.gmra.mxu0 %v1516
    %v1780 = vpop.f32.mrf.mxu0
    %v1781 = vadd.f32 %v1692, %v1780
    %v1782 = vpop.f32.mrf.mxu0
    %v1783 = vadd.f32 %v1694, %v1782
    %1784 = vmatmul.bf16.gmra.mxu0 %v1518
    %v1785 = vpop.f32.mrf.mxu0
    %v1786 = vadd.f32 %v1697, %v1785
    %v1787 = vpop.f32.mrf.mxu0
    %v1788 = vadd.f32 %v1699, %v1787
    %1789 = vmatmul.bf16.gmra.mxu0 %v1520
    %v1790 = vpop.f32.mrf.mxu0
    %v1791 = vadd.f32 %v1702, %v1790
    %v1792 = vpop.f32.mrf.mxu0
    %v1793 = vadd.f32 %v1704, %v1792
    %1794 = vmatmul.bf16.gmra.mxu0 %v1522
    %v1795 = vpop.f32.mrf.mxu0
    %v1796 = vadd.f32 %v1707, %v1795
    %v1797 = vpop.f32.mrf.mxu0
    %v1798 = vadd.f32 %v1709, %v1797
    %1799 = vmatmul.bf16.gmra.mxu0 %v1524
    %v1800 = vpop.f32.mrf.mxu0
    %v1801 = vadd.f32 %v1712, %v1800
    %v1802 = vpop.f32.mrf.mxu0
    %v1803 = vadd.f32 %v1714, %v1802
    %1804 = vmatmul.bf16.gmra.mxu0 %v1526
    %v1805 = vpop.f32.mrf.mxu0
    %v1806 = vadd.f32 %v1717, %v1805
    %v1807 = vpop.f32.mrf.mxu0
    %v1808 = vadd.f32 %v1719, %v1807
    %1809 = vmatmul.bf16.gmra.mxu0 %v1528
    %v1810 = vpop.f32.mrf.mxu0
    %v1811 = vadd.f32 %v1722, %v1810
    %v1812 = vpop.f32.mrf.mxu0
    %v1813 = vadd.f32 %v1724, %v1812
    %1814 = vmatmul.bf16.gmra.mxu0 %v1530
    %v1815 = vpop.f32.mrf.mxu0
    %v1816 = vadd.f32 %v1727, %v1815
    %v1817 = vpop.f32.mrf.mxu0
    %v1818 = vadd.f32 %v1729, %v1817
    %1819 = vmatmul.bf16.gmra.mxu0 %v1532
    %v1820 = vpop.f32.mrf.mxu0
    %v1821 = vadd.f32 %v1732, %v1820
    %v1822 = vpop.f32.mrf.mxu0
    %v1823 = vadd.f32 %v1734, %v1822
    %1824 = vmatmul.bf16.gmra.mxu0 %v1534
    %v1825 = vpop.f32.mrf.mxu0
    %v1826 = vadd.f32 %v1737, %v1825
    %v1827 = vpop.f32.mrf.mxu0
    %v1828 = vadd.f32 %v1739, %v1827
    %1829 = vmatmul.bf16.gmra.mxu0 %v1536
    %v1830 = vpop.f32.mrf.mxu0
    %v1831 = vadd.f32 %v1742, %v1830
    %v1832 = vpop.f32.mrf.mxu0
    %v1833 = vadd.f32 %v1744, %v1832
    %1834 = vmatmul.bf16.gmra.mxu0 %v1538
    %v1835 = vpop.f32.mrf.mxu0
    %v1836 = vadd.f32 %v1747, %v1835
    %v1837 = vpop.f32.mrf.mxu0
    %v1838 = vadd.f32 %v1749, %v1837
    %1839 = vmatmul.bf16.gmra.mxu0 %v1540
    %v1840 = vpop.f32.mrf.mxu0
    %v1841 = vadd.f32 %v1752, %v1840
    %v1842 = vpop.f32.mrf.mxu0
    %v1843 = vadd.f32 %v1754, %v1842
    %1844 = vmatmul.bf16.gmra.mxu0 %v1542
    %v1845 = vpop.f32.mrf.mxu0
    %v1846 = vadd.f32 %v1757, %v1845
    %v1847 = vpop.f32.mrf.mxu0
    %v1848 = vadd.f32 %v1759, %v1847
    %1849 = vmatmul.bf16.gmra.mxu0 %v1544
    %v1850 = vpop.f32.mrf.mxu0
    %v1851 = vadd.f32 %v1762, %v1850
    %v1852 = vpop.f32.mrf.mxu0
    %v1853 = vadd.f32 %v1764, %v1852
    %1854 = vdwg.mxu0
    %v1855 = vmul.f32 %v1776, 0.2
    %v1856 = vmul.f32 %v1778, 0.2
    %v1857 = vmul.f32 %v1781, 0.2
    %v1858 = vmul.f32 %v1783, 0.2
    %v1859 = vmul.f32 %v1786, 0.2
    %v1860 = vmul.f32 %v1788, 0.2
    %v1861 = vmul.f32 %v1791, 0.2
    %v1862 = vmul.f32 %v1793, 0.2
    %v1863 = vmul.f32 %v1796, 0.2
    %v1864 = vmul.f32 %v1798, 0.2
    %v1865 = vmul.f32 %v1801, 0.2
    %v1866 = vmul.f32 %v1803, 0.2
    %v1867 = vmul.f32 %v1806, 0.2
    %v1868 = vmul.f32 %v1808, 0.2
    %v1869 = vmul.f32 %v1811, 0.2
    %v1870 = vmul.f32 %v1813, 0.2
    %v1871 = vmul.f32 %v1816, 0.2
    %v1872 = vmul.f32 %v1818, 0.2
    %v1873 = vmul.f32 %v1821, 0.2
    %v1874 = vmul.f32 %v1823, 0.2
    %v1875 = vmul.f32 %v1826, 0.2
    %v1876 = vmul.f32 %v1828, 0.2
    %v1877 = vmul.f32 %v1831, 0.2
    %v1878 = vmul.f32 %v1833, 0.2
    %v1879 = vmul.f32 %v1836, 0.2
    %v1880 = vmul.f32 %v1838, 0.2
    %v1881 = vmul.f32 %v1841, 0.2
    %v1882 = vmul.f32 %v1843, 0.2
    %v1883 = vmul.f32 %v1846, 0.2
    %v1884 = vmul.f32 %v1848, 0.2
    %v1885 = vmul.f32 %v1851, 0.2
    %v1886 = vmul.f32 %v1853, 0.2
    %v1887 = vmax.f32 %v1776, %v1855
    %v1888 = vmax.f32 %v1778, %v1856
    %v1889 = vmax.f32 %v1781, %v1857
    %v1890 = vmax.f32 %v1783, %v1858
    %v1891 = vmax.f32 %v1786, %v1859
    %v1892 = vmax.f32 %v1788, %v1860
    %v1893 = vmax.f32 %v1791, %v1861
    %v1894 = vmax.f32 %v1793, %v1862
    %v1895 = vmax.f32 %v1796, %v1863
    %v1896 = vmax.f32 %v1798, %v1864
    %v1897 = vmax.f32 %v1801, %v1865
    %v1898 = vmax.f32 %v1803, %v1866
    %v1899 = vmax.f32 %v1806, %v1867
    %v1900 = vmax.f32 %v1808, %v1868
    %v1901 = vmax.f32 %v1811, %v1869
    %v1902 = vmax.f32 %v1813, %v1870
    %v1903 = vmax.f32 %v1816, %v1871
    %v1904 = vmax.f32 %v1818, %v1872
    %v1905 = vmax.f32 %v1821, %v1873
    %v1906 = vmax.f32 %v1823, %v1874
    %v1907 = vmax.f32 %v1826, %v1875
    %v1908 = vmax.f32 %v1828, %v1876
    %v1909 = vmax.f32 %v1831, %v1877
    %v1910 = vmax.f32 %v1833, %v1878
    %v1911 = vmax.f32 %v1836, %v1879
    %v1912 = vmax.f32 %v1838, %v1880
    %v1913 = vmax.f32 %v1841, %v1881
    %v1914 = vmax.f32 %v1843, %v1882
    %v1915 = vmax.f32 %v1846, %v1883
    %v1916 = vmax.f32 %v1848, %v1884
    %v1917 = vmax.f32 %v1851, %v1885
    %v1918 = vmax.f32 %v1853, %v1886
    %v1919 = vpack.c.bf16 %v1888, %v1887
    %v1920 = vpack.c.bf16 %v1890, %v1889
    %v1921 = vpack.c.bf16 %v1892, %v1891
    %v1922 = vpack.c.bf16 %v1894, %v1893
    %v1923 = vpack.c.bf16 %v1896, %v1895
    %v1924 = vpack.c.bf16 %v1898, %v1897
    %v1925 = vpack.c.bf16 %v1900, %v1899
    %v1926 = vpack.c.bf16 %v1902, %v1901
    %v1927 = vpack.c.bf16 %v1904, %v1903
    %v1928 = vpack.c.bf16 %v1906, %v1905
    %v1929 = vpack.c.bf16 %v1908, %v1907
    %v1930 = vpack.c.bf16 %v1910, %v1909
    %v1931 = vpack.c.bf16 %v1912, %v1911
    %v1932 = vpack.c.bf16 %v1914, %v1913
    %v1933 = vpack.c.bf16 %v1916, %v1915
    %v1934 = vpack.c.bf16 %v1918, %v1917
    %v1935 = vld [vmem:[#allocation9] sm:$0xf]
    %v1936 = vld [vmem:[#allocation9 + $0x4] sm:$0xf]
    %v1937 = vld [vmem:[#allocation9 + $0x8] sm:$0xf]
    %v1938 = vld [vmem:[#allocation9 + $0xc] sm:$0xf]
    %v1939 = vld [vmem:[#allocation9 + $0x10] sm:$0xf]
    %v1940 = vld [vmem:[#allocation9 + $0x14] sm:$0xf]
    %v1941 = vld [vmem:[#allocation9 + $0x18] sm:$0xf]
    %v1942 = vld [vmem:[#allocation9 + $0x1c] sm:$0xf]
    %v1943 = vld [vmem:[#allocation9 + $0x20] sm:$0xf]
    %v1944 = vld [vmem:[#allocation9 + $0x24] sm:$0xf]
    %v1945 = vld [vmem:[#allocation9 + $0x28] sm:$0xf]
    %v1946 = vld [vmem:[#allocation9 + $0x2c] sm:$0xf]
    %v1947 = vld [vmem:[#allocation9 + $0x30] sm:$0xf]
    %v1948 = vld [vmem:[#allocation9 + $0x34] sm:$0xf]
    %v1949 = vld [vmem:[#allocation9 + $0x38] sm:$0xf]
    %v1950 = vld [vmem:[#allocation9 + $0x3c] sm:$0xf]
    %s1951 = sld [smem:[#allocation2]]
    %v1952 = vstv %s1951
    %v1969 = vunpack.c.l.b16 %v1935
    %v1970 = vunpack.c.l.b16 %v1936
    %v1971 = vunpack.c.l.b16 %v1937
    %v1972 = vunpack.c.l.b16 %v1938
    %v1973 = vunpack.c.l.b16 %v1939
    %v1974 = vunpack.c.l.b16 %v1940
    %v1975 = vunpack.c.l.b16 %v1941
    %v1976 = vunpack.c.l.b16 %v1942
    %v1977 = vunpack.c.l.b16 %v1943
    %v1978 = vunpack.c.l.b16 %v1944
    %v1979 = vunpack.c.l.b16 %v1945
    %v1980 = vunpack.c.l.b16 %v1946
    %v1981 = vunpack.c.l.b16 %v1947
    %v1982 = vunpack.c.l.b16 %v1948
    %v1983 = vunpack.c.l.b16 %v1949
    %v1984 = vunpack.c.l.b16 %v1950
    %v1985 = vpack.c.b16 %v1970, %v1969
    %v1986 = vpack.c.b16 %v1972, %v1971
    %v1987 = vpack.c.b16 %v1974, %v1973
    %v1988 = vpack.c.b16 %v1976, %v1975
    %v1989 = vpack.c.b16 %v1978, %v1977
    %v1990 = vpack.c.b16 %v1980, %v1979
    %v1991 = vpack.c.b16 %v1982, %v1981
    %v1992 = vpack.c.b16 %v1984, %v1983
    %2001 = vmatpush.bf16.msra.mxu0 %v1992
    %2002 = vmatpush.bf16.msra.mxu0 %v1991
    %2003 = vmatpush.bf16.msra.mxu0 %v1990
    %2004 = vmatpush.bf16.msra.mxu0 %v1989
    %2005 = vmatpush.bf16.msra.mxu0 %v1988
    %2006 = vmatpush.bf16.msra.mxu0 %v1987
    %2007 = vmatpush.bf16.msra.mxu0 %v1986
    %2008 = vmatpush.bf16.msra.mxu0 %v1985
    %2009 = vmatmul.bf16.gmra.mxu0 %v1919
    %v2010 = vpop.f32.mrf.mxu0
    %v2011 = vadd.f32 %v1952, %v2010
    %v2012 = vpop.f32.mrf.mxu0
    %v2013 = vadd.f32 %v1952, %v2012
    %2014 = vmatmul.bf16.gmra.mxu0 %v1920
    %v2015 = vpop.f32.mrf.mxu0
    %v2016 = vadd.f32 %v1952, %v2015
    %v2017 = vpop.f32.mrf.mxu0
    %v2018 = vadd.f32 %v1952, %v2017
    %2019 = vmatmul.bf16.gmra.mxu0 %v1921
    %v2020 = vpop.f32.mrf.mxu0
    %v2021 = vadd.f32 %v1952, %v2020
    %v2022 = vpop.f32.mrf.mxu0
    %v2023 = vadd.f32 %v1952, %v2022
    %2024 = vmatmul.bf16.gmra.mxu0 %v1922
    %v2025 = vpop.f32.mrf.mxu0
    %v2026 = vadd.f32 %v1952, %v2025
    %v2027 = vpop.f32.mrf.mxu0
    %v2028 = vadd.f32 %v1952, %v2027
    %2029 = vmatmul.bf16.gmra.mxu0 %v1923
    %v2030 = vpop.f32.mrf.mxu0
    %v2031 = vadd.f32 %v1952, %v2030
    %v2032 = vpop.f32.mrf.mxu0
    %v2033 = vadd.f32 %v1952, %v2032
    %2034 = vmatmul.bf16.gmra.mxu0 %v1924
    %v2035 = vpop.f32.mrf.mxu0
    %v2036 = vadd.f32 %v1952, %v2035
    %v2037 = vpop.f32.mrf.mxu0
    %v2038 = vadd.f32 %v1952, %v2037
    %2039 = vmatmul.bf16.gmra.mxu0 %v1925
    %v2040 = vpop.f32.mrf.mxu0
    %v2041 = vadd.f32 %v1952, %v2040
    %v2042 = vpop.f32.mrf.mxu0
    %v2043 = vadd.f32 %v1952, %v2042
    %2044 = vmatmul.bf16.gmra.mxu0 %v1926
    %v2045 = vpop.f32.mrf.mxu0
    %v2046 = vadd.f32 %v1952, %v2045
    %v2047 = vpop.f32.mrf.mxu0
    %v2048 = vadd.f32 %v1952, %v2047
    %2049 = vmatmul.bf16.gmra.mxu0 %v1927
    %v2050 = vpop.f32.mrf.mxu0
    %v2051 = vadd.f32 %v1952, %v2050
    %v2052 = vpop.f32.mrf.mxu0
    %v2053 = vadd.f32 %v1952, %v2052
    %2054 = vmatmul.bf16.gmra.mxu0 %v1928
    %v2055 = vpop.f32.mrf.mxu0
    %v2056 = vadd.f32 %v1952, %v2055
    %v2057 = vpop.f32.mrf.mxu0
    %v2058 = vadd.f32 %v1952, %v2057
    %2059 = vmatmul.bf16.gmra.mxu0 %v1929
    %v2060 = vpop.f32.mrf.mxu0
    %v2061 = vadd.f32 %v1952, %v2060
    %v2062 = vpop.f32.mrf.mxu0
    %v2063 = vadd.f32 %v1952, %v2062
    %2064 = vmatmul.bf16.gmra.mxu0 %v1930
    %v2065 = vpop.f32.mrf.mxu0
    %v2066 = vadd.f32 %v1952, %v2065
    %v2067 = vpop.f32.mrf.mxu0
    %v2068 = vadd.f32 %v1952, %v2067
    %2069 = vmatmul.bf16.gmra.mxu0 %v1931
    %v2070 = vpop.f32.mrf.mxu0
    %v2071 = vadd.f32 %v1952, %v2070
    %v2072 = vpop.f32.mrf.mxu0
    %v2073 = vadd.f32 %v1952, %v2072
    %2074 = vmatmul.bf16.gmra.mxu0 %v1932
    %v2075 = vpop.f32.mrf.mxu0
    %v2076 = vadd.f32 %v1952, %v2075
    %v2077 = vpop.f32.mrf.mxu0
    %v2078 = vadd.f32 %v1952, %v2077
    %2079 = vmatmul.bf16.gmra.mxu0 %v1933
    %v2080 = vpop.f32.mrf.mxu0
    %v2081 = vadd.f32 %v1952, %v2080
    %v2082 = vpop.f32.mrf.mxu0
    %v2083 = vadd.f32 %v1952, %v2082
    %2084 = vmatmul.bf16.gmra.mxu0 %v1934
    %v2085 = vpop.f32.mrf.mxu0
    %v2086 = vadd.f32 %v1952, %v2085
    %v2087 = vpop.f32.mrf.mxu0
    %v2088 = vadd.f32 %v1952, %v2087
    %2089 = vdwg.mxu0
    %v2090 = vsub.f32 0.0, %v2011
    %v2091 = vsub.f32 0.0, %v2013
    %v2092 = vsub.f32 0.0, %v2016
    %v2093 = vsub.f32 0.0, %v2018
    %v2094 = vsub.f32 0.0, %v2021
    %v2095 = vsub.f32 0.0, %v2023
    %v2096 = vsub.f32 0.0, %v2026
    %v2097 = vsub.f32 0.0, %v2028
    %v2098 = vsub.f32 0.0, %v2031
    %v2099 = vsub.f32 0.0, %v2033
    %v2100 = vsub.f32 0.0, %v2036
    %v2101 = vsub.f32 0.0, %v2038
    %v2102 = vsub.f32 0.0, %v2041
    %v2103 = vsub.f32 0.0, %v2043
    %v2104 = vsub.f32 0.0, %v2046
    %v2105 = vsub.f32 0.0, %v2048
    %v2106 = vsub.f32 0.0, %v2051
    %v2107 = vsub.f32 0.0, %v2053
    %v2108 = vsub.f32 0.0, %v2056
    %v2109 = vsub.f32 0.0, %v2058
    %v2110 = vsub.f32 0.0, %v2061
    %v2111 = vsub.f32 0.0, %v2063
    %v2112 = vsub.f32 0.0, %v2066
    %v2113 = vsub.f32 0.0, %v2068
    %v2114 = vsub.f32 0.0, %v2071
    %v2115 = vsub.f32 0.0, %v2073
    %v2116 = vsub.f32 0.0, %v2076
    %v2117 = vsub.f32 0.0, %v2078
    %v2118 = vsub.f32 0.0, %v2081
    %v2119 = vsub.f32 0.0, %v2083
    %v2120 = vsub.f32 0.0, %v2086
    %v2121 = vsub.f32 0.0, %v2088
    %v2122 = vmul.f32 %v2090, 1.442695
    %v2123 = vpow.pop %v2122
    %v2124 = vmul.f32 %v2091, 1.442695
    %v2125 = vpow.pop %v2124
    %v2126 = vmul.f32 %v2092, 1.442695
    %v2127 = vpow.pop %v2126
    %v2128 = vmul.f32 %v2093, 1.442695
    %v2129 = vpow.pop %v2128
    %v2130 = vmul.f32 %v2094, 1.442695
    %v2131 = vpow.pop %v2130
    %v2132 = vmul.f32 %v2095, 1.442695
    %v2133 = vpow.pop %v2132
    %v2134 = vmul.f32 %v2096, 1.442695
    %v2135 = vpow.pop %v2134
    %v2136 = vmul.f32 %v2097, 1.442695
    %v2137 = vpow.pop %v2136
    %v2138 = vmul.f32 %v2098, 1.442695
    %v2139 = vpow.pop %v2138
    %v2140 = vmul.f32 %v2099, 1.442695
    %v2141 = vpow.pop %v2140
    %v2142 = vmul.f32 %v2100, 1.442695
    %v2143 = vpow.pop %v2142
    %v2144 = vmul.f32 %v2101, 1.442695
    %v2145 = vpow.pop %v2144
    %v2146 = vmul.f32 %v2102, 1.442695
    %v2147 = vpow.pop %v2146
    %v2148 = vmul.f32 %v2103, 1.442695
    %v2149 = vpow.pop %v2148
    %v2150 = vmul.f32 %v2104, 1.442695
    %v2151 = vpow.pop %v2150
    %v2152 = vmul.f32 %v2105, 1.442695
    %v2153 = vpow.pop %v2152
    %v2154 = vmul.f32 %v2106, 1.442695
    %v2155 = vpow.pop %v2154
    %v2156 = vmul.f32 %v2107, 1.442695
    %v2157 = vpow.pop %v2156
    %v2158 = vmul.f32 %v2108, 1.442695
    %v2159 = vpow.pop %v2158
    %v2160 = vmul.f32 %v2109, 1.442695
    %v2161 = vpow.pop %v2160
    %v2162 = vmul.f32 %v2110, 1.442695
    %v2163 = vpow.pop %v2162
    %v2164 = vmul.f32 %v2111, 1.442695
    %v2165 = vpow.pop %v2164
    %v2166 = vmul.f32 %v2112, 1.442695
    %v2167 = vpow.pop %v2166
    %v2168 = vmul.f32 %v2113, 1.442695
    %v2169 = vpow.pop %v2168
    %v2170 = vmul.f32 %v2114, 1.442695
    %v2171 = vpow.pop %v2170
    %v2172 = vmul.f32 %v2115, 1.442695
    %v2173 = vpow.pop %v2172
    %v2174 = vmul.f32 %v2116, 1.442695
    %v2175 = vpow.pop %v2174
    %v2176 = vmul.f32 %v2117, 1.442695
    %v2177 = vpow.pop %v2176
    %v2178 = vmul.f32 %v2118, 1.442695
    %v2179 = vpow.pop %v2178
    %v2180 = vmul.f32 %v2119, 1.442695
    %v2181 = vpow.pop %v2180
    %v2182 = vmul.f32 %v2120, 1.442695
    %v2183 = vpow.pop %v2182
    %v2184 = vmul.f32 %v2121, 1.442695
    %v2185 = vpow.pop %v2184
    %v2186 = vadd.f32 %v2123, 1.0
    %v2187 = vadd.f32 %v2125, 1.0
    %v2188 = vadd.f32 %v2127, 1.0
    %v2189 = vadd.f32 %v2129, 1.0
    %v2190 = vadd.f32 %v2131, 1.0
    %v2191 = vadd.f32 %v2133, 1.0
    %v2192 = vadd.f32 %v2135, 1.0
    %v2193 = vadd.f32 %v2137, 1.0
    %v2194 = vadd.f32 %v2139, 1.0
    %v2195 = vadd.f32 %v2141, 1.0
    %v2196 = vadd.f32 %v2143, 1.0
    %v2197 = vadd.f32 %v2145, 1.0
    %v2198 = vadd.f32 %v2147, 1.0
    %v2199 = vadd.f32 %v2149, 1.0
    %v2200 = vadd.f32 %v2151, 1.0
    %v2201 = vadd.f32 %v2153, 1.0
    %v2202 = vadd.f32 %v2155, 1.0
    %v2203 = vadd.f32 %v2157, 1.0
    %v2204 = vadd.f32 %v2159, 1.0
    %v2205 = vadd.f32 %v2161, 1.0
    %v2206 = vadd.f32 %v2163, 1.0
    %v2207 = vadd.f32 %v2165, 1.0
    %v2208 = vadd.f32 %v2167, 1.0
    %v2209 = vadd.f32 %v2169, 1.0
    %v2210 = vadd.f32 %v2171, 1.0
    %v2211 = vadd.f32 %v2173, 1.0
    %v2212 = vadd.f32 %v2175, 1.0
    %v2213 = vadd.f32 %v2177, 1.0
    %v2214 = vadd.f32 %v2179, 1.0
    %v2215 = vadd.f32 %v2181, 1.0
    %v2216 = vadd.f32 %v2183, 1.0
    %v2217 = vadd.f32 %v2185, 1.0
    %v2218 = vrcp.pop %v2186
    %v2219 = vmul.f32 %v2186, %v2218
    %v2220 = vsub.f32 1.0, %v2219
    %v2221 = vmul.f32 %v2218, %v2220
    %v2222 = vadd.f32 %v2218, %v2221
    %vm2223 = vweird.f32 %v2186
    %vm2224 = vweird.f32 %v2218
    %vm2225 = vmor %vm2223, %vm2224
    %v2226 = vsel %vm2225, %v2218, %v2222
    %v2227 = vand.u32 2147483647, %v2186
    %vm2228 = vcmp.eq.f32.partialorder %v2227, 8.507059e+37
    %v2229 = vand.u32 %v2186, 2147483648
    %v2230 = vor.u32 1.1754944e-38, %v2229
    %v2231 = vsel %vm2228, %v2230, %v2226
    %v2232 = vrcp.pop %v2187
    %v2233 = vmul.f32 %v2187, %v2232
    %v2234 = vsub.f32 1.0, %v2233
    %v2235 = vmul.f32 %v2232, %v2234
    %v2236 = vadd.f32 %v2232, %v2235
    %vm2237 = vweird.f32 %v2187
    %vm2238 = vweird.f32 %v2232
    %vm2239 = vmor %vm2237, %vm2238
    %v2240 = vsel %vm2239, %v2232, %v2236
    %v2241 = vand.u32 2147483647, %v2187
    %vm2242 = vcmp.eq.f32.partialorder %v2241, 8.507059e+37
    %v2243 = vand.u32 %v2187, 2147483648
    %v2244 = vor.u32 1.1754944e-38, %v2243
    %v2245 = vsel %vm2242, %v2244, %v2240
    %v2246 = vrcp.pop %v2188
    %v2247 = vmul.f32 %v2188, %v2246
    %v2248 = vsub.f32 1.0, %v2247
    %v2249 = vmul.f32 %v2246, %v2248
    %v2250 = vadd.f32 %v2246, %v2249
    %vm2251 = vweird.f32 %v2188
    %vm2252 = vweird.f32 %v2246
    %vm2253 = vmor %vm2251, %vm2252
    %v2254 = vsel %vm2253, %v2246, %v2250
    %v2255 = vand.u32 2147483647, %v2188
    %vm2256 = vcmp.eq.f32.partialorder %v2255, 8.507059e+37
    %v2257 = vand.u32 %v2188, 2147483648
    %v2258 = vor.u32 1.1754944e-38, %v2257
    %v2259 = vsel %vm2256, %v2258, %v2254
    %v2260 = vrcp.pop %v2189
    %v2261 = vmul.f32 %v2189, %v2260
    %v2262 = vsub.f32 1.0, %v2261
    %v2263 = vmul.f32 %v2260, %v2262
    %v2264 = vadd.f32 %v2260, %v2263
    %vm2265 = vweird.f32 %v2189
    %vm2266 = vweird.f32 %v2260
    %vm2267 = vmor %vm2265, %vm2266
    %v2268 = vsel %vm2267, %v2260, %v2264
    %v2269 = vand.u32 2147483647, %v2189
    %vm2270 = vcmp.eq.f32.partialorder %v2269, 8.507059e+37
    %v2271 = vand.u32 %v2189, 2147483648
    %v2272 = vor.u32 1.1754944e-38, %v2271
    %v2273 = vsel %vm2270, %v2272, %v2268
    %v2274 = vrcp.pop %v2190
    %v2275 = vmul.f32 %v2190, %v2274
    %v2276 = vsub.f32 1.0, %v2275
    %v2277 = vmul.f32 %v2274, %v2276
    %v2278 = vadd.f32 %v2274, %v2277
    %vm2279 = vweird.f32 %v2190
    %vm2280 = vweird.f32 %v2274
    %vm2281 = vmor %vm2279, %vm2280
    %v2282 = vsel %vm2281, %v2274, %v2278
    %v2283 = vand.u32 2147483647, %v2190
    %vm2284 = vcmp.eq.f32.partialorder %v2283, 8.507059e+37
    %v2285 = vand.u32 %v2190, 2147483648
    %v2286 = vor.u32 1.1754944e-38, %v2285
    %v2287 = vsel %vm2284, %v2286, %v2282
    %v2288 = vrcp.pop %v2191
    %v2289 = vmul.f32 %v2191, %v2288
    %v2290 = vsub.f32 1.0, %v2289
    %v2291 = vmul.f32 %v2288, %v2290
    %v2292 = vadd.f32 %v2288, %v2291
    %vm2293 = vweird.f32 %v2191
    %vm2294 = vweird.f32 %v2288
    %vm2295 = vmor %vm2293, %vm2294
    %v2296 = vsel %vm2295, %v2288, %v2292
    %v2297 = vand.u32 2147483647, %v2191
    %vm2298 = vcmp.eq.f32.partialorder %v2297, 8.507059e+37
    %v2299 = vand.u32 %v2191, 2147483648
    %v2300 = vor.u32 1.1754944e-38, %v2299
    %v2301 = vsel %vm2298, %v2300, %v2296
    %v2302 = vrcp.pop %v2192
    %v2303 = vmul.f32 %v2192, %v2302
    %v2304 = vsub.f32 1.0, %v2303
    %v2305 = vmul.f32 %v2302, %v2304
    %v2306 = vadd.f32 %v2302, %v2305
    %vm2307 = vweird.f32 %v2192
    %vm2308 = vweird.f32 %v2302
    %vm2309 = vmor %vm2307, %vm2308
    %v2310 = vsel %vm2309, %v2302, %v2306
    %v2311 = vand.u32 2147483647, %v2192
    %vm2312 = vcmp.eq.f32.partialorder %v2311, 8.507059e+37
    %v2313 = vand.u32 %v2192, 2147483648
    %v2314 = vor.u32 1.1754944e-38, %v2313
    %v2315 = vsel %vm2312, %v2314, %v2310
    %v2316 = vrcp.pop %v2193
    %v2317 = vmul.f32 %v2193, %v2316
    %v2318 = vsub.f32 1.0, %v2317
    %v2319 = vmul.f32 %v2316, %v2318
    %v2320 = vadd.f32 %v2316, %v2319
    %vm2321 = vweird.f32 %v2193
    %vm2322 = vweird.f32 %v2316
    %vm2323 = vmor %vm2321, %vm2322
    %v2324 = vsel %vm2323, %v2316, %v2320
    %v2325 = vand.u32 2147483647, %v2193
    %vm2326 = vcmp.eq.f32.partialorder %v2325, 8.507059e+37
    %v2327 = vand.u32 %v2193, 2147483648
    %v2328 = vor.u32 1.1754944e-38, %v2327
    %v2329 = vsel %vm2326, %v2328, %v2324
    %v2330 = vrcp.pop %v2194
    %v2331 = vmul.f32 %v2194, %v2330
    %v2332 = vsub.f32 1.0, %v2331
    %v2333 = vmul.f32 %v2330, %v2332
    %v2334 = vadd.f32 %v2330, %v2333
    %vm2335 = vweird.f32 %v2194
    %vm2336 = vweird.f32 %v2330
    %vm2337 = vmor %vm2335, %vm2336
    %v2338 = vsel %vm2337, %v2330, %v2334
    %v2339 = vand.u32 2147483647, %v2194
    %vm2340 = vcmp.eq.f32.partialorder %v2339, 8.507059e+37
    %v2341 = vand.u32 %v2194, 2147483648
    %v2342 = vor.u32 1.1754944e-38, %v2341
    %v2343 = vsel %vm2340, %v2342, %v2338
    %v2344 = vrcp.pop %v2195
    %v2345 = vmul.f32 %v2195, %v2344
    %v2346 = vsub.f32 1.0, %v2345
    %v2347 = vmul.f32 %v2344, %v2346
    %v2348 = vadd.f32 %v2344, %v2347
    %vm2349 = vweird.f32 %v2195
    %vm2350 = vweird.f32 %v2344
    %vm2351 = vmor %vm2349, %vm2350
    %v2352 = vsel %vm2351, %v2344, %v2348
    %v2353 = vand.u32 2147483647, %v2195
    %vm2354 = vcmp.eq.f32.partialorder %v2353, 8.507059e+37
    %v2355 = vand.u32 %v2195, 2147483648
    %v2356 = vor.u32 1.1754944e-38, %v2355
    %v2357 = vsel %vm2354, %v2356, %v2352
    %v2358 = vrcp.pop %v2196
    %v2359 = vmul.f32 %v2196, %v2358
    %v2360 = vsub.f32 1.0, %v2359
    %v2361 = vmul.f32 %v2358, %v2360
    %v2362 = vadd.f32 %v2358, %v2361
    %vm2363 = vweird.f32 %v2196
    %vm2364 = vweird.f32 %v2358
    %vm2365 = vmor %vm2363, %vm2364
    %v2366 = vsel %vm2365, %v2358, %v2362
    %v2367 = vand.u32 2147483647, %v2196
    %vm2368 = vcmp.eq.f32.partialorder %v2367, 8.507059e+37
    %v2369 = vand.u32 %v2196, 2147483648
    %v2370 = vor.u32 1.1754944e-38, %v2369
    %v2371 = vsel %vm2368, %v2370, %v2366
    %v2372 = vrcp.pop %v2197
    %v2373 = vmul.f32 %v2197, %v2372
    %v2374 = vsub.f32 1.0, %v2373
    %v2375 = vmul.f32 %v2372, %v2374
    %v2376 = vadd.f32 %v2372, %v2375
    %vm2377 = vweird.f32 %v2197
    %vm2378 = vweird.f32 %v2372
    %vm2379 = vmor %vm2377, %vm2378
    %v2380 = vsel %vm2379, %v2372, %v2376
    %v2381 = vand.u32 2147483647, %v2197
    %vm2382 = vcmp.eq.f32.partialorder %v2381, 8.507059e+37
    %v2383 = vand.u32 %v2197, 2147483648
    %v2384 = vor.u32 1.1754944e-38, %v2383
    %v2385 = vsel %vm2382, %v2384, %v2380
    %v2386 = vrcp.pop %v2198
    %v2387 = vmul.f32 %v2198, %v2386
    %v2388 = vsub.f32 1.0, %v2387
    %v2389 = vmul.f32 %v2386, %v2388
    %v2390 = vadd.f32 %v2386, %v2389
    %vm2391 = vweird.f32 %v2198
    %vm2392 = vweird.f32 %v2386
    %vm2393 = vmor %vm2391, %vm2392
    %v2394 = vsel %vm2393, %v2386, %v2390
    %v2395 = vand.u32 2147483647, %v2198
    %vm2396 = vcmp.eq.f32.partialorder %v2395, 8.507059e+37
    %v2397 = vand.u32 %v2198, 2147483648
    %v2398 = vor.u32 1.1754944e-38, %v2397
    %v2399 = vsel %vm2396, %v2398, %v2394
    %v2400 = vrcp.pop %v2199
    %v2401 = vmul.f32 %v2199, %v2400
    %v2402 = vsub.f32 1.0, %v2401
    %v2403 = vmul.f32 %v2400, %v2402
    %v2404 = vadd.f32 %v2400, %v2403
    %vm2405 = vweird.f32 %v2199
    %vm2406 = vweird.f32 %v2400
    %vm2407 = vmor %vm2405, %vm2406
    %v2408 = vsel %vm2407, %v2400, %v2404
    %v2409 = vand.u32 2147483647, %v2199
    %vm2410 = vcmp.eq.f32.partialorder %v2409, 8.507059e+37
    %v2411 = vand.u32 %v2199, 2147483648
    %v2412 = vor.u32 1.1754944e-38, %v2411
    %v2413 = vsel %vm2410, %v2412, %v2408
    %v2414 = vrcp.pop %v2200
    %v2415 = vmul.f32 %v2200, %v2414
    %v2416 = vsub.f32 1.0, %v2415
    %v2417 = vmul.f32 %v2414, %v2416
    %v2418 = vadd.f32 %v2414, %v2417
    %vm2419 = vweird.f32 %v2200
    %vm2420 = vweird.f32 %v2414
    %vm2421 = vmor %vm2419, %vm2420
    %v2422 = vsel %vm2421, %v2414, %v2418
    %v2423 = vand.u32 2147483647, %v2200
    %vm2424 = vcmp.eq.f32.partialorder %v2423, 8.507059e+37
    %v2425 = vand.u32 %v2200, 2147483648
    %v2426 = vor.u32 1.1754944e-38, %v2425
    %v2427 = vsel %vm2424, %v2426, %v2422
    %v2428 = vrcp.pop %v2201
    %v2429 = vmul.f32 %v2201, %v2428
    %v2430 = vsub.f32 1.0, %v2429
    %v2431 = vmul.f32 %v2428, %v2430
    %v2432 = vadd.f32 %v2428, %v2431
    %vm2433 = vweird.f32 %v2201
    %vm2434 = vweird.f32 %v2428
    %vm2435 = vmor %vm2433, %vm2434
    %v2436 = vsel %vm2435, %v2428, %v2432
    %v2437 = vand.u32 2147483647, %v2201
    %vm2438 = vcmp.eq.f32.partialorder %v2437, 8.507059e+37
    %v2439 = vand.u32 %v2201, 2147483648
    %v2440 = vor.u32 1.1754944e-38, %v2439
    %v2441 = vsel %vm2438, %v2440, %v2436
    %v2442 = vrcp.pop %v2202
    %v2443 = vmul.f32 %v2202, %v2442
    %v2444 = vsub.f32 1.0, %v2443
    %v2445 = vmul.f32 %v2442, %v2444
    %v2446 = vadd.f32 %v2442, %v2445
    %vm2447 = vweird.f32 %v2202
    %vm2448 = vweird.f32 %v2442
    %vm2449 = vmor %vm2447, %vm2448
    %v2450 = vsel %vm2449, %v2442, %v2446
    %v2451 = vand.u32 2147483647, %v2202
    %vm2452 = vcmp.eq.f32.partialorder %v2451, 8.507059e+37
    %v2453 = vand.u32 %v2202, 2147483648
    %v2454 = vor.u32 1.1754944e-38, %v2453
    %v2455 = vsel %vm2452, %v2454, %v2450
    %v2456 = vrcp.pop %v2203
    %v2457 = vmul.f32 %v2203, %v2456
    %v2458 = vsub.f32 1.0, %v2457
    %v2459 = vmul.f32 %v2456, %v2458
    %v2460 = vadd.f32 %v2456, %v2459
    %vm2461 = vweird.f32 %v2203
    %vm2462 = vweird.f32 %v2456
    %vm2463 = vmor %vm2461, %vm2462
    %v2464 = vsel %vm2463, %v2456, %v2460
    %v2465 = vand.u32 2147483647, %v2203
    %vm2466 = vcmp.eq.f32.partialorder %v2465, 8.507059e+37
    %v2467 = vand.u32 %v2203, 2147483648
    %v2468 = vor.u32 1.1754944e-38, %v2467
    %v2469 = vsel %vm2466, %v2468, %v2464
    %v2470 = vrcp.pop %v2204
    %v2471 = vmul.f32 %v2204, %v2470
    %v2472 = vsub.f32 1.0, %v2471
    %v2473 = vmul.f32 %v2470, %v2472
    %v2474 = vadd.f32 %v2470, %v2473
    %vm2475 = vweird.f32 %v2204
    %vm2476 = vweird.f32 %v2470
    %vm2477 = vmor %vm2475, %vm2476
    %v2478 = vsel %vm2477, %v2470, %v2474
    %v2479 = vand.u32 2147483647, %v2204
    %vm2480 = vcmp.eq.f32.partialorder %v2479, 8.507059e+37
    %v2481 = vand.u32 %v2204, 2147483648
    %v2482 = vor.u32 1.1754944e-38, %v2481
    %v2483 = vsel %vm2480, %v2482, %v2478
    %v2484 = vrcp.pop %v2205
    %v2485 = vmul.f32 %v2205, %v2484
    %v2486 = vsub.f32 1.0, %v2485
    %v2487 = vmul.f32 %v2484, %v2486
    %v2488 = vadd.f32 %v2484, %v2487
    %vm2489 = vweird.f32 %v2205
    %vm2490 = vweird.f32 %v2484
    %vm2491 = vmor %vm2489, %vm2490
    %v2492 = vsel %vm2491, %v2484, %v2488
    %v2493 = vand.u32 2147483647, %v2205
    %vm2494 = vcmp.eq.f32.partialorder %v2493, 8.507059e+37
    %v2495 = vand.u32 %v2205, 2147483648
    %v2496 = vor.u32 1.1754944e-38, %v2495
    %v2497 = vsel %vm2494, %v2496, %v2492
    %v2498 = vrcp.pop %v2206
    %v2499 = vmul.f32 %v2206, %v2498
    %v2500 = vsub.f32 1.0, %v2499
    %v2501 = vmul.f32 %v2498, %v2500
    %v2502 = vadd.f32 %v2498, %v2501
    %vm2503 = vweird.f32 %v2206
    %vm2504 = vweird.f32 %v2498
    %vm2505 = vmor %vm2503, %vm2504
    %v2506 = vsel %vm2505, %v2498, %v2502
    %v2507 = vand.u32 2147483647, %v2206
    %vm2508 = vcmp.eq.f32.partialorder %v2507, 8.507059e+37
    %v2509 = vand.u32 %v2206, 2147483648
    %v2510 = vor.u32 1.1754944e-38, %v2509
    %v2511 = vsel %vm2508, %v2510, %v2506
    %v2512 = vrcp.pop %v2207
    %v2513 = vmul.f32 %v2207, %v2512
    %v2514 = vsub.f32 1.0, %v2513
    %v2515 = vmul.f32 %v2512, %v2514
    %v2516 = vadd.f32 %v2512, %v2515
    %vm2517 = vweird.f32 %v2207
    %vm2518 = vweird.f32 %v2512
    %vm2519 = vmor %vm2517, %vm2518
    %v2520 = vsel %vm2519, %v2512, %v2516
    %v2521 = vand.u32 2147483647, %v2207
    %vm2522 = vcmp.eq.f32.partialorder %v2521, 8.507059e+37
    %v2523 = vand.u32 %v2207, 2147483648
    %v2524 = vor.u32 1.1754944e-38, %v2523
    %v2525 = vsel %vm2522, %v2524, %v2520
    %v2526 = vrcp.pop %v2208
    %v2527 = vmul.f32 %v2208, %v2526
    %v2528 = vsub.f32 1.0, %v2527
    %v2529 = vmul.f32 %v2526, %v2528
    %v2530 = vadd.f32 %v2526, %v2529
    %vm2531 = vweird.f32 %v2208
    %vm2532 = vweird.f32 %v2526
    %vm2533 = vmor %vm2531, %vm2532
    %v2534 = vsel %vm2533, %v2526, %v2530
    %v2535 = vand.u32 2147483647, %v2208
    %vm2536 = vcmp.eq.f32.partialorder %v2535, 8.507059e+37
    %v2537 = vand.u32 %v2208, 2147483648
    %v2538 = vor.u32 1.1754944e-38, %v2537
    %v2539 = vsel %vm2536, %v2538, %v2534
    %v2540 = vrcp.pop %v2209
    %v2541 = vmul.f32 %v2209, %v2540
    %v2542 = vsub.f32 1.0, %v2541
    %v2543 = vmul.f32 %v2540, %v2542
    %v2544 = vadd.f32 %v2540, %v2543
    %vm2545 = vweird.f32 %v2209
    %vm2546 = vweird.f32 %v2540
    %vm2547 = vmor %vm2545, %vm2546
    %v2548 = vsel %vm2547, %v2540, %v2544
    %v2549 = vand.u32 2147483647, %v2209
    %vm2550 = vcmp.eq.f32.partialorder %v2549, 8.507059e+37
    %v2551 = vand.u32 %v2209, 2147483648
    %v2552 = vor.u32 1.1754944e-38, %v2551
    %v2553 = vsel %vm2550, %v2552, %v2548
    %v2554 = vrcp.pop %v2210
    %v2555 = vmul.f32 %v2210, %v2554
    %v2556 = vsub.f32 1.0, %v2555
    %v2557 = vmul.f32 %v2554, %v2556
    %v2558 = vadd.f32 %v2554, %v2557
    %vm2559 = vweird.f32 %v2210
    %vm2560 = vweird.f32 %v2554
    %vm2561 = vmor %vm2559, %vm2560
    %v2562 = vsel %vm2561, %v2554, %v2558
    %v2563 = vand.u32 2147483647, %v2210
    %vm2564 = vcmp.eq.f32.partialorder %v2563, 8.507059e+37
    %v2565 = vand.u32 %v2210, 2147483648
    %v2566 = vor.u32 1.1754944e-38, %v2565
    %v2567 = vsel %vm2564, %v2566, %v2562
    %v2568 = vrcp.pop %v2211
    %v2569 = vmul.f32 %v2211, %v2568
    %v2570 = vsub.f32 1.0, %v2569
    %v2571 = vmul.f32 %v2568, %v2570
    %v2572 = vadd.f32 %v2568, %v2571
    %vm2573 = vweird.f32 %v2211
    %vm2574 = vweird.f32 %v2568
    %vm2575 = vmor %vm2573, %vm2574
    %v2576 = vsel %vm2575, %v2568, %v2572
    %v2577 = vand.u32 2147483647, %v2211
    %vm2578 = vcmp.eq.f32.partialorder %v2577, 8.507059e+37
    %v2579 = vand.u32 %v2211, 2147483648
    %v2580 = vor.u32 1.1754944e-38, %v2579
    %v2581 = vsel %vm2578, %v2580, %v2576
    %v2582 = vrcp.pop %v2212
    %v2583 = vmul.f32 %v2212, %v2582
    %v2584 = vsub.f32 1.0, %v2583
    %v2585 = vmul.f32 %v2582, %v2584
    %v2586 = vadd.f32 %v2582, %v2585
    %vm2587 = vweird.f32 %v2212
    %vm2588 = vweird.f32 %v2582
    %vm2589 = vmor %vm2587, %vm2588
    %v2590 = vsel %vm2589, %v2582, %v2586
    %v2591 = vand.u32 2147483647, %v2212
    %vm2592 = vcmp.eq.f32.partialorder %v2591, 8.507059e+37
    %v2593 = vand.u32 %v2212, 2147483648
    %v2594 = vor.u32 1.1754944e-38, %v2593
    %v2595 = vsel %vm2592, %v2594, %v2590
    %v2596 = vrcp.pop %v2213
    %v2597 = vmul.f32 %v2213, %v2596
    %v2598 = vsub.f32 1.0, %v2597
    %v2599 = vmul.f32 %v2596, %v2598
    %v2600 = vadd.f32 %v2596, %v2599
    %vm2601 = vweird.f32 %v2213
    %vm2602 = vweird.f32 %v2596
    %vm2603 = vmor %vm2601, %vm2602
    %v2604 = vsel %vm2603, %v2596, %v2600
    %v2605 = vand.u32 2147483647, %v2213
    %vm2606 = vcmp.eq.f32.partialorder %v2605, 8.507059e+37
    %v2607 = vand.u32 %v2213, 2147483648
    %v2608 = vor.u32 1.1754944e-38, %v2607
    %v2609 = vsel %vm2606, %v2608, %v2604
    %v2610 = vrcp.pop %v2214
    %v2611 = vmul.f32 %v2214, %v2610
    %v2612 = vsub.f32 1.0, %v2611
    %v2613 = vmul.f32 %v2610, %v2612
    %v2614 = vadd.f32 %v2610, %v2613
    %vm2615 = vweird.f32 %v2214
    %vm2616 = vweird.f32 %v2610
    %vm2617 = vmor %vm2615, %vm2616
    %v2618 = vsel %vm2617, %v2610, %v2614
    %v2619 = vand.u32 2147483647, %v2214
    %vm2620 = vcmp.eq.f32.partialorder %v2619, 8.507059e+37
    %v2621 = vand.u32 %v2214, 2147483648
    %v2622 = vor.u32 1.1754944e-38, %v2621
    %v2623 = vsel %vm2620, %v2622, %v2618
    %v2624 = vrcp.pop %v2215
    %v2625 = vmul.f32 %v2215, %v2624
    %v2626 = vsub.f32 1.0, %v2625
    %v2627 = vmul.f32 %v2624, %v2626
    %v2628 = vadd.f32 %v2624, %v2627
    %vm2629 = vweird.f32 %v2215
    %vm2630 = vweird.f32 %v2624
    %vm2631 = vmor %vm2629, %vm2630
    %v2632 = vsel %vm2631, %v2624, %v2628
    %v2633 = vand.u32 2147483647, %v2215
    %vm2634 = vcmp.eq.f32.partialorder %v2633, 8.507059e+37
    %v2635 = vand.u32 %v2215, 2147483648
    %v2636 = vor.u32 1.1754944e-38, %v2635
    %v2637 = vsel %vm2634, %v2636, %v2632
    %v2638 = vrcp.pop %v2216
    %v2639 = vmul.f32 %v2216, %v2638
    %v2640 = vsub.f32 1.0, %v2639
    %v2641 = vmul.f32 %v2638, %v2640
    %v2642 = vadd.f32 %v2638, %v2641
    %vm2643 = vweird.f32 %v2216
    %vm2644 = vweird.f32 %v2638
    %vm2645 = vmor %vm2643, %vm2644
    %v2646 = vsel %vm2645, %v2638, %v2642
    %v2647 = vand.u32 2147483647, %v2216
    %vm2648 = vcmp.eq.f32.partialorder %v2647, 8.507059e+37
    %v2649 = vand.u32 %v2216, 2147483648
    %v2650 = vor.u32 1.1754944e-38, %v2649
    %v2651 = vsel %vm2648, %v2650, %v2646
    %v2652 = vrcp.pop %v2217
    %v2653 = vmul.f32 %v2217, %v2652
    %v2654 = vsub.f32 1.0, %v2653
    %v2655 = vmul.f32 %v2652, %v2654
    %v2656 = vadd.f32 %v2652, %v2655
    %vm2657 = vweird.f32 %v2217
    %vm2658 = vweird.f32 %v2652
    %vm2659 = vmor %vm2657, %vm2658
    %v2660 = vsel %vm2659, %v2652, %v2656
    %v2661 = vand.u32 2147483647, %v2217
    %vm2662 = vcmp.eq.f32.partialorder %v2661, 8.507059e+37
    %v2663 = vand.u32 %v2217, 2147483648
    %v2664 = vor.u32 1.1754944e-38, %v2663
    %v2665 = vsel %vm2662, %v2664, %v2660
    %2666 = vst [vmem:[#allocation11] sm:$0xff] %v2231
    %2667 = vst [vmem:[#allocation11 + $0x8] sm:$0xff] %v2245
    %2668 = vst [vmem:[#allocation11 + $0x10] sm:$0xff] %v2259
    %2669 = vst [vmem:[#allocation11 + $0x18] sm:$0xff] %v2273
    %2670 = vst [vmem:[#allocation11 + $0x20] sm:$0xff] %v2287
    %2671 = vst [vmem:[#allocation11 + $0x28] sm:$0xff] %v2301
    %2672 = vst [vmem:[#allocation11 + $0x30] sm:$0xff] %v2315
    %2673 = vst [vmem:[#allocation11 + $0x38] sm:$0xff] %v2329
    %2674 = vst [vmem:[#allocation11 + $0x40] sm:$0xff] %v2343
    %2675 = vst [vmem:[#allocation11 + $0x48] sm:$0xff] %v2357
    %2676 = vst [vmem:[#allocation11 + $0x50] sm:$0xff] %v2371
    %2677 = vst [vmem:[#allocation11 + $0x58] sm:$0xff] %v2385
    %2678 = vst [vmem:[#allocation11 + $0x60] sm:$0xff] %v2399
    %2679 = vst [vmem:[#allocation11 + $0x68] sm:$0xff] %v2413
    %2680 = vst [vmem:[#allocation11 + $0x70] sm:$0xff] %v2427
    %2681 = vst [vmem:[#allocation11 + $0x78] sm:$0xff] %v2441
    %2682 = vst [vmem:[#allocation11 + $0x80] sm:$0xff] %v2455
    %2683 = vst [vmem:[#allocation11 + $0x88] sm:$0xff] %v2469
    %2684 = vst [vmem:[#allocation11 + $0x90] sm:$0xff] %v2483
    %2685 = vst [vmem:[#allocation11 + $0x98] sm:$0xff] %v2497
    %2686 = vst [vmem:[#allocation11 + $0xa0] sm:$0xff] %v2511
    %2687 = vst [vmem:[#allocation11 + $0xa8] sm:$0xff] %v2525
    %2688 = vst [vmem:[#allocation11 + $0xb0] sm:$0xff] %v2539
    %2689 = vst [vmem:[#allocation11 + $0xb8] sm:$0xff] %v2553
    %2690 = vst [vmem:[#allocation11 + $0xc0] sm:$0xff] %v2567
    %2691 = vst [vmem:[#allocation11 + $0xc8] sm:$0xff] %v2581
    %2692 = vst [vmem:[#allocation11 + $0xd0] sm:$0xff] %v2595
    %2693 = vst [vmem:[#allocation11 + $0xd8] sm:$0xff] %v2609
    %2694 = vst [vmem:[#allocation11 + $0xe0] sm:$0xff] %v2623
    %2695 = vst [vmem:[#allocation11 + $0xe8] sm:$0xff] %v2637
    %2696 = vst [vmem:[#allocation11 + $0xf0] sm:$0xff] %v2651
    %2697 = vst [vmem:[#allocation11 + $0xf8] sm:$0xff] %v2665
    // Predicated region
    $region46: #{tpu_custom_call.1} parent=1 // pred_check
      _
    $region47: #{tpu_custom_call.1} parent=1 // pred_check_branch
      %2699 = sbr.rel (0) target = $region49
    $region48: #{tpu_custom_call.1} parent=1 // pred_region
      %2701 = vsyncadd [#allocation5], 896
      %s2702 = sshll.u32 [#allocation11], 4
      %s2703 = int_to_ptr.vmem [resolvable:$true] %s2702
      %s2704 = sshll.u32 %s7, 4
      %s2705 = int_to_ptr.hbm [resolvable:$true] %s2704
      %2710 = dma.vmem_to_hbm [thread:$0]  %s2703, 3200, %s2705, [#allocation5], 128, 128, 8
    $region49: #{tpu_custom_call.1} parent=1 // pred_fallthru
      _
    // Predicated region
    $region50: #{tpu_custom_call.1} parent=1 // pred_check
      _
    $region51: #{tpu_custom_call.1} parent=1 // pred_check_branch
      %2712 = sbr.rel (0) target = $region53
    $region52: #{tpu_custom_call.1} parent=1 // pred_region
      %2714 = dma.done [#allocation5], 4096
    $region53: #{tpu_custom_call.1} parent=1 // pred_fallthru
      _
    %2715 = vsyncpa [#allocation4], 1
    %2716 = vsyncpa [#allocation7], 1
    %2717 = vsyncpa [#allocation10], 1
    %2718 = vsyncpa [#allocation5], 1

</llo_original>
